<compile_context>
chip_gen: v7x
topology: tpu7x:2x2x1
jax: 0.10.0
libtpu: 0.0.40
codegen_flags: <defaults>
</compile_context>

<pallas_src>
import numpy as np

import jax
import jax.numpy as jnp
from jax import lax
from jax.experimental import pallas as pl
from jax.experimental.pallas import tpu as pltpu

# ---- model hyperparameters (small, consistent with the module) -------------
NC = 3                 # input channels
NEF = 8                # base encoder width
IMAGE_SIZE = 16        # args.image_size
OUT_SIZE = IMAGE_SIZE // 16
NZ = 8                 # latent size
BATCH = 2
BN_EPS = 1e-5
LRELU_SLOPE = 0.2


# ---------------------------- Pallas kernel ---------------------------------
def _encoder_kernel(x_ref,
                    u1_ref, b1_ref, u2_ref, b2_ref,
                    u3_ref, b3_ref, u4_ref, b4_ref,
                    wh_ref, bh_ref, eps_ref,
                    z_ref, mean_ref, logvar_ref):
    """Fully fused encoder: 4x conv+BN+LeakyReLU, fused mean/logvar head, sampler."""

    def conv_bn_lrelu(h, u_ref, b_ref):
        # conv+BN folded into one bf16 matmul (f32 accumulate) + bias + LeakyReLU
        acc = jnp.dot(h.astype(jnp.bfloat16), u_ref[...],
                      preferred_element_type=jnp.float32)
        acc = acc + b_ref[...]
        return jnp.where(acc >= 0.0, acc, LRELU_SLOPE * acc)

    h = x_ref[...]                       # (B, NC*H*W), CHW-flat (== NCHW .view)
    h = conv_bn_lrelu(h, u1_ref, b1_ref)  # (B,  NEF*8*8)
    h = conv_bn_lrelu(h, u2_ref, b2_ref)  # (B, 2NEF*4*4)
    h = conv_bn_lrelu(h, u3_ref, b3_ref)  # (B, 4NEF*2*2)
    h = conv_bn_lrelu(h, u4_ref, b4_ref)  # (B, 8NEF*1*1)  == hidden.view(B,-1)

    # fused mean/logvar head: one matmul, then static lane slices
    ml = jnp.dot(h.astype(jnp.bfloat16), wh_ref[...],
                 preferred_element_type=jnp.float32) + bh_ref[...]
    mean = ml[:, :NZ]
    logvar = ml[:, NZ:]
    std = jnp.exp(0.5 * logvar)          # sampler: std = exp(0.5*logvar) (EUP)
    z_ref[...] = eps_ref[...] * std + mean
    mean_ref[...] = mean
    logvar_ref[...] = logvar


# ------------------------------ wrappers -------------------------------------
def _full_spec(shape):
    nd = len(shape)
    return pl.BlockSpec(shape, lambda i, _nd=nd: (0,) * _nd)


def encoder_forward(x_nchw, eps, fused_params):
    u1, b1, u2, b2, u3, b3, u4, b4, wh, bh = fused_params
    batch = x_nchw.shape[0]
    x_flat = x_nchw.reshape(batch, -1)   # NCHW flatten == CHW-flat per image

    operands = (x_flat, u1, b1, u2, b2, u3, b3, u4, b4, wh, bh, eps)
    z, mean, logvar = pl.pallas_call(
        _encoder_kernel,
        grid=(1,),
        in_specs=[_full_spec(a.shape) for a in operands],
        out_specs=[_full_spec((batch, NZ))] * 3,
        out_shape=[jax.ShapeDtypeStruct((batch, NZ), jnp.float32)] * 3,
        # grid=(1,): whole problem fits trivially in VMEM; no tiling wanted.
        # TODO(synk): if batch/image_size grow, add a parallel batch grid axis so
        # both v7x TensorCores get work.
        compiler_params=pltpu.CompilerParams(
            dimension_semantics=("arbitrary",)),
    )(*operands)
    return z, mean, logvar


encoder_forward = jax.jit(encoder_forward)


# ------------------- host-side weight folding / unfolding -------------------
def _unfold_conv(w, b, gamma, beta, rmean, rvar, hin, win):
    """Dense matrix for Conv2d(k=4, s=2, p=1) fused with inference BatchNorm:
    maps CHW-flat input (Cin*Hin*Win,) -> CHW-flat output (Cout*Hout*Wout,)."""
    w = np.asarray(w, np.float32)                     # PyTorch OIHW (Cout,Cin,4,4)
    cout, cin, kh, kw = w.shape
    hout, wout = hin // 2, win // 2
    gamma = np.asarray(gamma, np.float32)
    beta = np.asarray(beta, np.float32)
    rmean = np.asarray(rmean, np.float32)
    rvar = np.asarray(rvar, np.float32)
    scale = gamma / np.sqrt(rvar + BN_EPS)            # BN affine folded in
    shift = beta - rmean * scale
    w_eff = w * scale[:, None, None, None]

    U = np.zeros((cin * hin * win, cout * hout * wout), np.float32)
    rows_c = np.arange(cin)[:, None] * (hin * win)    # (Cin, 1)
    cols_c = np.arange(cout)[None, :] * (hout * wout)  # (1, Cout)
    for dh in range(kh):
        for dw in range(kw):
            blk = w_eff[:, :, dh, dw].T               # (Cin, Cout)
            for oh in range(hout):
                ih = 2 * oh + dh - 1                  # padding=1, stride=2
                if ih < 0 or ih >= hin:
                    continue                          # zero padding -> no term
                for ow in range(wout):
                    iw = 2 * ow + dw - 1
                    if iw < 0 or iw >= win:
                        continue
                    U[rows_c + (ih * win + iw),
                      cols_c + (oh * wout + ow)] += blk

    bias = np.repeat(np.asarray(b, np.float32) * scale + shift, hout * wout)
    return U, bias


def prepare_fused_params(conv_params, head_params):
    """Fold BN into weights/bias, unfold convs, fuse mean/logvar head, cast to bf16."""
    fused = []
    hin = IMAGE_SIZE
    for (w, b, gamma, beta, rmean, rvar) in conv_params:
        U, bias = _unfold_conv(w, b, gamma, beta, rmean, rvar, hin, hin)
        fused.append(jnp.asarray(U, jnp.bfloat16))                    # MXU operand
        fused.append(jnp.asarray(bias.reshape(1, -1), jnp.float32))   # f32 epilogue
        hin //= 2

    wm, bm, wv, bv = head_params
    wh = jnp.concatenate([wm, wv], axis=1).astype(jnp.bfloat16)       # (feat, 2*NZ)
    bh = jnp.concatenate([bm, bv]).reshape(1, -1).astype(jnp.float32)
    fused += [wh, bh]
    return tuple(fused)


# ----------------------- deterministic parameter init ------------------------
def init_params(key):
    chans = [NC, NEF, NEF * 2, NEF * 4, NEF * 8]
    conv_params = []
    for i in range(4):
        key, k1, k2 = jax.random.split(key, 3)
        cin, cout = chans[i], chans[i + 1]
        w = jax.random.normal(k1, (cout, cin, 4, 4), jnp.float32) * 0.05  # OIHW
        b = jax.random.normal(k2, (cout,), jnp.float32) * 0.01
        gamma = jnp.ones((cout,), jnp.float32)
        beta = jnp.zeros((cout,), jnp.float32)
        rmean = jnp.zeros((cout,), jnp.float32)
        rvar = jnp.ones((cout,), jnp.float32)
        conv_params.append((w, b, gamma, beta, rmean, rvar))

    feat = NEF * 8 * OUT_SIZE * OUT_SIZE
    key, k1, k2, k3, k4 = jax.random.split(key, 5)
    wm = jax.random.normal(k1, (feat, NZ), jnp.float32) * 0.05
    bm = jax.random.normal(k2, (NZ,), jnp.float32) * 0.01
    wv = jax.random.normal(k3, (feat, NZ), jnp.float32) * 0.05
    bv = jax.random.normal(k4, (NZ,), jnp.float32) * 0.01
    return conv_params, (wm, bm, wv, bv), key


# ------------------------- pure-JAX reference (f32) ---------------------------
def reference_forward(x_nchw, conv_params, head_params, eps):
    y = x_nchw
    for (w, b, gamma, beta, rmean, rvar) in conv_params:
        y = lax.conv_general_dilated(
            y, w, window_strides=(2, 2), padding=((1, 1), (1, 1)),
            dimension_numbers=("NCHW", "OIHW", "NCHW"))
        y = y + b[None, :, None, None]
        scale = gamma / jnp.sqrt(rvar + BN_EPS)
        shift = beta - rmean * scale
        y = y * scale[None, :, None, None] + shift[None, :, None, None]
        y = jnp.where(y >= 0.0, y, LRELU_SLOPE * y)
    h = y.reshape(y.shape[0], -1)
    wm, bm, wv, bv = head_params
    mean = h @ wm + bm
    logvar = h @ wv + bv
    z = eps * jnp.exp(0.5 * logvar) + mean
    return z, mean, logvar


# --------------------------------- main --------------------------------------
if __name__ == "__main__":
    key = jax.random.PRNGKey(0)
    conv_params, head_params, key = init_params(key)
    fused_params = prepare_fused_params(conv_params, head_params)

    key, kx, keps = jax.random.split(key, 3)
    x = jax.random.normal(kx, (BATCH, NC, IMAGE_SIZE, IMAGE_SIZE), jnp.float32)
    eps = jax.random.normal(keps, (BATCH, NZ), jnp.float32)  # sampler noise

    z, mean, logvar = encoder_forward(x, eps, fused_params)
    jax.block_until_ready((z, mean, logvar))

    # correctness check against an f32 pure-JAX reference (kernel uses bf16 MXU
    # operands with f32 accumulation, hence the loose-ish tolerance).
    z_r, mean_r, logvar_r = reference_forward(x, conv_params, head_params, eps)
    np.testing.assert_allclose(np.asarray(mean), np.asarray(mean_r), rtol=5e-2, atol=5e-3)
    np.testing.assert_allclose(np.asarray(logvar), np.asarray(logvar_r), rtol=5e-2, atol=5e-3)
    np.testing.assert_allclose(np.asarray(z), np.asarray(z_r), rtol=5e-2, atol=5e-3)

    assert z.shape == (BATCH, NZ) and mean.shape == (BATCH, NZ) and logvar.shape == (BATCH, NZ)
    print("KERNEL_OK")
</pallas_src>

<mosaic_0001>
module attributes {stable_mosaic.version = 11 : i64} {
  func.func @_encoder_kernel(%arg0: i32, %arg1: memref<2x768xf32, #tpu.memory_space<vmem>>, %arg2: memref<768x512xbf16, #tpu.memory_space<vmem>>, %arg3: memref<1x512xf32, #tpu.memory_space<vmem>>, %arg4: memref<512x256xbf16, #tpu.memory_space<vmem>>, %arg5: memref<1x256xf32, #tpu.memory_space<vmem>>, %arg6: memref<256x128xbf16, #tpu.memory_space<vmem>>, %arg7: memref<1x128xf32, #tpu.memory_space<vmem>>, %arg8: memref<128x64xbf16, #tpu.memory_space<vmem>>, %arg9: memref<1x64xf32, #tpu.memory_space<vmem>>, %arg10: memref<64x16xbf16, #tpu.memory_space<vmem>>, %arg11: memref<1x16xf32, #tpu.memory_space<vmem>>, %arg12: memref<2x8xf32, #tpu.memory_space<vmem>>, %arg13: memref<2x8xf32, #tpu.memory_space<vmem>>, %arg14: memref<2x8xf32, #tpu.memory_space<vmem>>, %arg15: memref<2x8xf32, #tpu.memory_space<vmem>>) attributes {dimension_semantics = [#tpu.dimension_semantics<arbitrary>], iteration_bounds = array<i64: 1>, scalar_prefetch = 0 : i64, scratch_operands = 0 : i64, tpu.core_type = #tpu.core_type<tc>, window_params = [{pipeline_mode = #tpu.pipeline_mode<synchronous>, transform_indices = @transform_0, window_bounds = array<i64: 2, 768>}, {pipeline_mode = #tpu.pipeline_mode<synchronous>, transform_indices = @transform_1, window_bounds = array<i64: 768, 512>}, {pipeline_mode = #tpu.pipeline_mode<synchronous>, transform_indices = @transform_2, window_bounds = array<i64: 1, 512>}, {pipeline_mode = #tpu.pipeline_mode<synchronous>, transform_indices = @transform_3, window_bounds = array<i64: 512, 256>}, {pipeline_mode = #tpu.pipeline_mode<synchronous>, transform_indices = @transform_4, window_bounds = array<i64: 1, 256>}, {pipeline_mode = #tpu.pipeline_mode<synchronous>, transform_indices = @transform_5, window_bounds = array<i64: 256, 128>}, {pipeline_mode = #tpu.pipeline_mode<synchronous>, transform_indices = @transform_6, window_bounds = array<i64: 1, 128>}, {pipeline_mode = #tpu.pipeline_mode<synchronous>, transform_indices = @transform_7, window_bounds = array<i64: 128, 64>}, {pipeline_mode = #tpu.pipeline_mode<synchronous>, transform_indices = @transform_8, window_bounds = array<i64: 1, 64>}, {pipeline_mode = #tpu.pipeline_mode<synchronous>, transform_indices = @transform_9, window_bounds = array<i64: 64, 16>}, {pipeline_mode = #tpu.pipeline_mode<synchronous>, transform_indices = @transform_10, window_bounds = array<i64: 1, 16>}, {pipeline_mode = #tpu.pipeline_mode<synchronous>, transform_indices = @transform_11, window_bounds = array<i64: 2, 8>}, {pipeline_mode = #tpu.pipeline_mode<synchronous>, transform_indices = @transform_12, window_bounds = array<i64: 2, 8>}, {pipeline_mode = #tpu.pipeline_mode<synchronous>, transform_indices = @transform_13, window_bounds = array<i64: 2, 8>}, {pipeline_mode = #tpu.pipeline_mode<synchronous>, transform_indices = @transform_14, window_bounds = array<i64: 2, 8>}]} {
    %c0 = arith.constant 0 : index
    %c0_0 = arith.constant 0 : index
    %0 = vector.load %arg1[%c0, %c0_0] : memref<2x768xf32, #tpu.memory_space<vmem>>, vector<2x768xf32>
    %1 = arith.truncf %0 : vector<2x768xf32> to vector<2x768xbf16>
    %c0_1 = arith.constant 0 : index
    %c0_2 = arith.constant 0 : index
    %2 = vector.load %arg2[%c0_1, %c0_2] : memref<768x512xbf16, #tpu.memory_space<vmem>>, vector<768x512xbf16>
    %cst = arith.constant dense<0.000000e+00> : vector<2x512xf32>
    %3 = tpu.matmul %1, %2, %cst {dimension_numbers = #tpu.dot_dimension_numbers<[1], [0], [0], [1], [0, 0, 1, 1], [], []>} : vector<2x768xbf16>, vector<768x512xbf16>, vector<2x512xf32> -> vector<2x512xf32>
    %c0_3 = arith.constant 0 : index
    %c0_4 = arith.constant 0 : index
    %4 = vector.load %arg3[%c0_3, %c0_4] : memref<1x512xf32, #tpu.memory_space<vmem>>, vector<1x512xf32>
    %5 = vector.broadcast %4 : vector<1x512xf32> to vector<2x512xf32>
    %6 = arith.addf %3, %5 : vector<2x512xf32>
    %cst_5 = arith.constant 0.000000e+00 : f32
    %7 = vector.broadcast %cst_5 : f32 to vector<2x512xf32>
    %8 = arith.cmpf oge, %6, %7 : vector<2x512xf32>
    %cst_6 = arith.constant 2.000000e-01 : f32
    %9 = vector.broadcast %cst_6 : f32 to vector<2x512xf32>
    %10 = arith.mulf %9, %6 : vector<2x512xf32>
    %11 = arith.select %8, %6, %10 : vector<2x512xi1>, vector<2x512xf32>
    %12 = arith.truncf %11 : vector<2x512xf32> to vector<2x512xbf16>
    %c0_7 = arith.constant 0 : index
    %c0_8 = arith.constant 0 : index
    %13 = vector.load %arg4[%c0_7, %c0_8] : memref<512x256xbf16, #tpu.memory_space<vmem>>, vector<512x256xbf16>
    %cst_9 = arith.constant dense<0.000000e+00> : vector<2x256xf32>
    %14 = tpu.matmul %12, %13, %cst_9 {dimension_numbers = #tpu.dot_dimension_numbers<[1], [0], [0], [1], [0, 0, 1, 1], [], []>} : vector<2x512xbf16>, vector<512x256xbf16>, vector<2x256xf32> -> vector<2x256xf32>
    %c0_10 = arith.constant 0 : index
    %c0_11 = arith.constant 0 : index
    %15 = vector.load %arg5[%c0_10, %c0_11] : memref<1x256xf32, #tpu.memory_space<vmem>>, vector<1x256xf32>
    %16 = vector.broadcast %15 : vector<1x256xf32> to vector<2x256xf32>
    %17 = arith.addf %14, %16 : vector<2x256xf32>
    %cst_12 = arith.constant 0.000000e+00 : f32
    %18 = vector.broadcast %cst_12 : f32 to vector<2x256xf32>
    %19 = arith.cmpf oge, %17, %18 : vector<2x256xf32>
    %cst_13 = arith.constant 2.000000e-01 : f32
    %20 = vector.broadcast %cst_13 : f32 to vector<2x256xf32>
    %21 = arith.mulf %20, %17 : vector<2x256xf32>
    %22 = arith.select %19, %17, %21 : vector<2x256xi1>, vector<2x256xf32>
    %23 = arith.truncf %22 : vector<2x256xf32> to vector<2x256xbf16>
    %c0_14 = arith.constant 0 : index
    %c0_15 = arith.constant 0 : index
    %24 = vector.load %arg6[%c0_14, %c0_15] : memref<256x128xbf16, #tpu.memory_space<vmem>>, vector<256x128xbf16>
    %cst_16 = arith.constant dense<0.000000e+00> : vector<2x128xf32>
    %25 = tpu.matmul %23, %24, %cst_16 {dimension_numbers = #tpu.dot_dimension_numbers<[1], [0], [0], [1], [0, 0, 1, 1], [], []>} : vector<2x256xbf16>, vector<256x128xbf16>, vector<2x128xf32> -> vector<2x128xf32>
    %c0_17 = arith.constant 0 : index
    %c0_18 = arith.constant 0 : index
    %26 = vector.load %arg7[%c0_17, %c0_18] : memref<1x128xf32, #tpu.memory_space<vmem>>, vector<1x128xf32>
    %27 = vector.broadcast %26 : vector<1x128xf32> to vector<2x128xf32>
    %28 = arith.addf %25, %27 : vector<2x128xf32>
    %cst_19 = arith.constant 0.000000e+00 : f32
    %29 = vector.broadcast %cst_19 : f32 to vector<2x128xf32>
    %30 = arith.cmpf oge, %28, %29 : vector<2x128xf32>
    %cst_20 = arith.constant 2.000000e-01 : f32
    %31 = vector.broadcast %cst_20 : f32 to vector<2x128xf32>
    %32 = arith.mulf %31, %28 : vector<2x128xf32>
    %33 = arith.select %30, %28, %32 : vector<2x128xi1>, vector<2x128xf32>
    %34 = arith.truncf %33 : vector<2x128xf32> to vector<2x128xbf16>
    %c0_21 = arith.constant 0 : index
    %c0_22 = arith.constant 0 : index
    %35 = vector.load %arg8[%c0_21, %c0_22] : memref<128x64xbf16, #tpu.memory_space<vmem>>, vector<128x64xbf16>
    %cst_23 = arith.constant dense<0.000000e+00> : vector<2x64xf32>
    %36 = tpu.matmul %34, %35, %cst_23 {dimension_numbers = #tpu.dot_dimension_numbers<[1], [0], [0], [1], [0, 0, 1, 1], [], []>} : vector<2x128xbf16>, vector<128x64xbf16>, vector<2x64xf32> -> vector<2x64xf32>
    %c0_24 = arith.constant 0 : index
    %c0_25 = arith.constant 0 : index
    %37 = vector.load %arg9[%c0_24, %c0_25] : memref<1x64xf32, #tpu.memory_space<vmem>>, vector<1x64xf32>
    %38 = vector.broadcast %37 : vector<1x64xf32> to vector<2x64xf32>
    %39 = arith.addf %36, %38 : vector<2x64xf32>
    %cst_26 = arith.constant 0.000000e+00 : f32
    %40 = vector.broadcast %cst_26 : f32 to vector<2x64xf32>
    %41 = arith.cmpf oge, %39, %40 : vector<2x64xf32>
    %cst_27 = arith.constant 2.000000e-01 : f32
    %42 = vector.broadcast %cst_27 : f32 to vector<2x64xf32>
    %43 = arith.mulf %42, %39 : vector<2x64xf32>
    %44 = arith.select %41, %39, %43 : vector<2x64xi1>, vector<2x64xf32>
    %45 = arith.truncf %44 : vector<2x64xf32> to vector<2x64xbf16>
    %c0_28 = arith.constant 0 : index
    %c0_29 = arith.constant 0 : index
    %46 = vector.load %arg10[%c0_28, %c0_29] : memref<64x16xbf16, #tpu.memory_space<vmem>>, vector<64x16xbf16>
    %cst_30 = arith.constant dense<0.000000e+00> : vector<2x16xf32>
    %47 = tpu.matmul %45, %46, %cst_30 {dimension_numbers = #tpu.dot_dimension_numbers<[1], [0], [0], [1], [0, 0, 1, 1], [], []>} : vector<2x64xbf16>, vector<64x16xbf16>, vector<2x16xf32> -> vector<2x16xf32>
    %c0_31 = arith.constant 0 : index
    %c0_32 = arith.constant 0 : index
    %48 = vector.load %arg11[%c0_31, %c0_32] : memref<1x16xf32, #tpu.memory_space<vmem>>, vector<1x16xf32>
    %49 = vector.broadcast %48 : vector<1x16xf32> to vector<2x16xf32>
    %50 = arith.addf %47, %49 : vector<2x16xf32>
    %51 = vector.extract_strided_slice %50 {offsets = [0, 0], sizes = [2, 8], strides = [1, 1]} : vector<2x16xf32> to vector<2x8xf32>
    %52 = vector.extract_strided_slice %50 {offsets = [0, 8], sizes = [2, 8], strides = [1, 1]} : vector<2x16xf32> to vector<2x8xf32>
    %cst_33 = arith.constant 5.000000e-01 : f32
    %53 = vector.broadcast %cst_33 : f32 to vector<2x8xf32>
    %54 = arith.mulf %53, %52 : vector<2x8xf32>
    %55 = math.exp %54 : vector<2x8xf32>
    %c0_34 = arith.constant 0 : index
    %c0_35 = arith.constant 0 : index
    %56 = vector.load %arg12[%c0_34, %c0_35] : memref<2x8xf32, #tpu.memory_space<vmem>>, vector<2x8xf32>
    %57 = arith.mulf %56, %55 : vector<2x8xf32>
    %58 = arith.addf %57, %51 : vector<2x8xf32>
    %c0_36 = arith.constant 0 : index
    %c0_37 = arith.constant 0 : index
    %59 = vector.load %arg13[%c0_36, %c0_37] : memref<2x8xf32, #tpu.memory_space<vmem>>, vector<2x8xf32>
    tpu.vector_store %arg13[%c0_36, %c0_37], %58 {strides = array<i32>} : memref<2x8xf32, #tpu.memory_space<vmem>>, vector<2x8xf32>,
    %c0_38 = arith.constant 0 : index
    %c0_39 = arith.constant 0 : index
    %60 = vector.load %arg14[%c0_38, %c0_39] : memref<2x8xf32, #tpu.memory_space<vmem>>, vector<2x8xf32>
    tpu.vector_store %arg14[%c0_38, %c0_39], %51 {strides = array<i32>} : memref<2x8xf32, #tpu.memory_space<vmem>>, vector<2x8xf32>,
    %c0_40 = arith.constant 0 : index
    %c0_41 = arith.constant 0 : index
    %61 = vector.load %arg15[%c0_40, %c0_41] : memref<2x8xf32, #tpu.memory_space<vmem>>, vector<2x8xf32>
    tpu.vector_store %arg15[%c0_40, %c0_41], %52 {strides = array<i32>} : memref<2x8xf32, #tpu.memory_space<vmem>>, vector<2x8xf32>,
    return
  }
  func.func @transform_0(%arg0: i32) -> (i32, i32) {
    %c0_i32 = arith.constant 0 : i32
    %c0_i32_0 = arith.constant 0 : i32
    %c0_i32_1 = arith.constant 0 : i32
    return %c0_i32, %c0_i32_0 : i32, i32
  }
  func.func @transform_1(%arg0: i32) -> (i32, i32) {
    %c0_i32 = arith.constant 0 : i32
    %c0_i32_0 = arith.constant 0 : i32
    %c0_i32_1 = arith.constant 0 : i32
    return %c0_i32, %c0_i32_0 : i32, i32
  }
  func.func @transform_2(%arg0: i32) -> (i32, i32) {
    %c0_i32 = arith.constant 0 : i32
    %c0_i32_0 = arith.constant 0 : i32
    %c0_i32_1 = arith.constant 0 : i32
    return %c0_i32, %c0_i32_0 : i32, i32
  }
  func.func @transform_3(%arg0: i32) -> (i32, i32) {
    %c0_i32 = arith.constant 0 : i32
    %c0_i32_0 = arith.constant 0 : i32
    %c0_i32_1 = arith.constant 0 : i32
    return %c0_i32, %c0_i32_0 : i32, i32
  }
  func.func @transform_4(%arg0: i32) -> (i32, i32) {
    %c0_i32 = arith.constant 0 : i32
    %c0_i32_0 = arith.constant 0 : i32
    %c0_i32_1 = arith.constant 0 : i32
    return %c0_i32, %c0_i32_0 : i32, i32
  }
  func.func @transform_5(%arg0: i32) -> (i32, i32) {
    %c0_i32 = arith.constant 0 : i32
    %c0_i32_0 = arith.constant 0 : i32
    %c0_i32_1 = arith.constant 0 : i32
    return %c0_i32, %c0_i32_0 : i32, i32
  }
  func.func @transform_6(%arg0: i32) -> (i32, i32) {
    %c0_i32 = arith.constant 0 : i32
    %c0_i32_0 = arith.constant 0 : i32
    %c0_i32_1 = arith.constant 0 : i32
    return %c0_i32, %c0_i32_0 : i32, i32
  }
  func.func @transform_7(%arg0: i32) -> (i32, i32) {
    %c0_i32 = arith.constant 0 : i32
    %c0_i32_0 = arith.constant 0 : i32
    %c0_i32_1 = arith.constant 0 : i32
    return %c0_i32, %c0_i32_0 : i32, i32
  }
  func.func @transform_8(%arg0: i32) -> (i32, i32) {
    %c0_i32 = arith.constant 0 : i32
    %c0_i32_0 = arith.constant 0 : i32
    %c0_i32_1 = arith.constant 0 : i32
    return %c0_i32, %c0_i32_0 : i32, i32
  }
  func.func @transform_9(%arg0: i32) -> (i32, i32) {
    %c0_i32 = arith.constant 0 : i32
    %c0_i32_0 = arith.constant 0 : i32
    %c0_i32_1 = arith.constant 0 : i32
    return %c0_i32, %c0_i32_0 : i32, i32
  }
  func.func @transform_10(%arg0: i32) -> (i32, i32) {
    %c0_i32 = arith.constant 0 : i32
    %c0_i32_0 = arith.constant 0 : i32
    %c0_i32_1 = arith.constant 0 : i32
    return %c0_i32, %c0_i32_0 : i32, i32
  }
  func.func @transform_11(%arg0: i32) -> (i32, i32) {
    %c0_i32 = arith.constant 0 : i32
    %c0_i32_0 = arith.constant 0 : i32
    %c0_i32_1 = arith.constant 0 : i32
    return %c0_i32, %c0_i32_0 : i32, i32
  }
  func.func @transform_12(%arg0: i32) -> (i32, i32) {
    %c0_i32 = arith.constant 0 : i32
    %c0_i32_0 = arith.constant 0 : i32
    %c0_i32_1 = arith.constant 0 : i32
    return %c0_i32, %c0_i32_0 : i32, i32
  }
  func.func @transform_13(%arg0: i32) -> (i32, i32) {
    %c0_i32 = arith.constant 0 : i32
    %c0_i32_0 = arith.constant 0 : i32
    %c0_i32_1 = arith.constant 0 : i32
    return %c0_i32, %c0_i32_0 : i32, i32
  }
  func.func @transform_14(%arg0: i32) -> (i32, i32) {
    %c0_i32 = arith.constant 0 : i32
    %c0_i32_0 = arith.constant 0 : i32
    %c0_i32_1 = arith.constant 0 : i32
    return %c0_i32, %c0_i32_0 : i32, i32
  }
}

</mosaic_0001>

<llo_original>
// kernel: encoder_forward.1
$region0: #{encoder_forward.1}
  #allocation0 [shape = 'u32[]', space=smem, size = 0x4, offset = 0x4, fixed_abs, tag = 'smem constant byte address 0x4 - core index']
  #allocation1 [shape = 'u32[144,128]{1,0:T(1,128)}', space=vmem, size = 0x12000, scoped, tag = 'internal scratch']
  %s0 = inlined_call_operand.vmem [shape: f32[2,768], index: 0, kind: input, shape index: {}]
  %s1 = inlined_call_operand.hbm [shape: bf16[768,512], index: 1, kind: input, shape index: {}]
  %s2 = inlined_call_operand.vmem [shape: f32[1,512], index: 2, kind: input, shape index: {}]
  %s3 = inlined_call_operand.hbm [shape: bf16[512,256], index: 3, kind: input, shape index: {}]
  %s4 = inlined_call_operand.vmem [shape: f32[1,256], index: 4, kind: input, shape index: {}]
  %s5 = inlined_call_operand.vmem [shape: bf16[256,128], index: 5, kind: input, shape index: {}]
  %s6 = inlined_call_operand.vmem [shape: f32[1,128], index: 6, kind: input, shape index: {}]
  %s7 = inlined_call_operand.vmem [shape: bf16[128,64], index: 7, kind: input, shape index: {}]
  %s8 = inlined_call_operand.vmem [shape: f32[1,64], index: 8, kind: input, shape index: {}]
  %s9 = inlined_call_operand.vmem [shape: bf16[64,16], index: 9, kind: input, shape index: {}]
  %s10 = inlined_call_operand.vmem [shape: f32[1,16], index: 10, kind: input, shape index: {}]
  %s11 = inlined_call_operand.vmem [shape: f32[2,8], index: 11, kind: input, shape index: {}]
  %s12 = inlined_call_operand.hbm [shape: f32[2,8], index: 12, kind: output, shape index: {0}]
  %s13 = inlined_call_operand.hbm [shape: f32[2,8], index: 13, kind: output, shape index: {1}]
  %s14 = inlined_call_operand.hbm [shape: f32[2,8], index: 14, kind: output, shape index: {2}]
  %15 = xla_tuple %s12, %s13, %s14
  %s16 = sld [smem:[#allocation0]]
  $region82: #{encoder_forward.1} parent=0
    _
  %s18 = ssub.s32 1, %s16
  %s19 = scalar_select 0, %s18, %s16
  $region1: #{encoder_forward.1} parent=0
    #allocation2 [shape = 'u8[786432]{0}', space=vmem, size = 0xc0000, scoped, tag = 'input window, operand 1, single buffered']
    #allocation3 [shape = 's32[1]{0}', space=sflag, size = 0x4, scoped, tag = 'scoped memory for encoder_forward.1']
    #allocation4 [shape = 's32[1]{0}', space=sflag, size = 0x4, scoped, tag = 'scoped memory for encoder_forward.1']
    #allocation5 [shape = 'u8[262144]{0}', space=vmem, size = 0x40000, scoped, tag = 'input window, operand 3, single buffered']
    #allocation6 [shape = 's32[1]{0}', space=sflag, size = 0x4, scoped, tag = 'scoped memory for encoder_forward.1']
    #allocation7 [shape = 'u8[1024]{0}', space=vmem, size = 0x400, scoped, tag = 'output window, operand 0, single buffered']
    #allocation8 [shape = 'u8[1024]{0}', space=vmem, size = 0x400, scoped, tag = 'output window, operand 1, single buffered']
    #allocation9 [shape = 's32[1]{0}', space=sflag, size = 0x4, scoped, tag = 'scoped memory for encoder_forward.1']
    #allocation10 [shape = 'u8[1024]{0}', space=vmem, size = 0x400, scoped, tag = 'output window, operand 2, single buffered']
    %20 = vsyncpa [#allocation3], 0
    %21 = vsyncpa [#allocation6], 0
    %22 = vsyncpa [#allocation4], 0
    %23 = vsyncpa [#allocation9], 0
    // Predicated region
    $region2: #{encoder_forward.1} parent=1 // pred_check
      _
    $region3: #{encoder_forward.1} parent=1 // pred_check_branch
      %25 = sbr.rel (0) target = $region5
    $region4: #{encoder_forward.1} parent=1 // pred_region
      _
    $region5: #{encoder_forward.1} parent=1 // pred_fallthru
      _
    // Predicated region
    $region6: #{encoder_forward.1} parent=1 // pred_check
      _
    $region7: #{encoder_forward.1} parent=1 // pred_check_branch
      %27 = sbr.rel (0) target = $region9
    $region8: #{encoder_forward.1} parent=1 // pred_region
      %s29 = ssub.s32 24576, 24576
      %30 = vsyncadd [#allocation3], %s29
      %s31 = sshll.u32 [#allocation2], 4
      %s32 = int_to_ptr.vmem [resolvable:$true] %s31
      %37 = dma.hbm_to_vmem [thread:$0]  %s1, 24576, %s32, [#allocation3], 256, 256, 16
    $region9: #{encoder_forward.1} parent=1 // pred_fallthru
      _
    // Predicated region
    $region10: #{encoder_forward.1} parent=1 // pred_check
      _
    $region11: #{encoder_forward.1} parent=1 // pred_check_branch
      %39 = sbr.rel (0) target = $region13
    $region12: #{encoder_forward.1} parent=1 // pred_region
      _
    $region13: #{encoder_forward.1} parent=1 // pred_fallthru
      _
    // Predicated region
    $region14: #{encoder_forward.1} parent=1 // pred_check
      _
    $region15: #{encoder_forward.1} parent=1 // pred_check_branch
      %41 = sbr.rel (0) target = $region17
    $region16: #{encoder_forward.1} parent=1 // pred_region
      %s43 = ssub.s32 8192, 8192
      %44 = vsyncadd [#allocation6], %s43
      %s45 = sshll.u32 [#allocation5], 4
      %s46 = int_to_ptr.vmem [resolvable:$true] %s45
      %51 = dma.hbm_to_vmem [thread:$0]  %s3, 8192, %s46, [#allocation6], 128, 128, 8
    $region17: #{encoder_forward.1} parent=1 // pred_fallthru
      _
    // Predicated region
    $region18: #{encoder_forward.1} parent=1 // pred_check
      _
    $region19: #{encoder_forward.1} parent=1 // pred_check_branch
      %53 = sbr.rel (0) target = $region21
    $region20: #{encoder_forward.1} parent=1 // pred_region
      _
    $region21: #{encoder_forward.1} parent=1 // pred_fallthru
      _
    // Predicated region
    $region22: #{encoder_forward.1} parent=1 // pred_check
      _
    $region23: #{encoder_forward.1} parent=1 // pred_check_branch
      %55 = sbr.rel (0) target = $region25
    $region24: #{encoder_forward.1} parent=1 // pred_region
      _
    $region25: #{encoder_forward.1} parent=1 // pred_fallthru
      _
    // Predicated region
    $region26: #{encoder_forward.1} parent=1 // pred_check
      _
    $region27: #{encoder_forward.1} parent=1 // pred_check_branch
      %57 = sbr.rel (0) target = $region29
    $region28: #{encoder_forward.1} parent=1 // pred_region
      _
    $region29: #{encoder_forward.1} parent=1 // pred_fallthru
      _
    // Predicated region
    $region30: #{encoder_forward.1} parent=1 // pred_check
      _
    $region31: #{encoder_forward.1} parent=1 // pred_check_branch
      %59 = sbr.rel (0) target = $region33
    $region32: #{encoder_forward.1} parent=1 // pred_region
      _
    $region33: #{encoder_forward.1} parent=1 // pred_fallthru
      _
    // Predicated region
    $region34: #{encoder_forward.1} parent=1 // pred_check
      _
    $region35: #{encoder_forward.1} parent=1 // pred_check_branch
      %61 = sbr.rel (0) target = $region37
    $region36: #{encoder_forward.1} parent=1 // pred_region
      _
    $region37: #{encoder_forward.1} parent=1 // pred_fallthru
      _
    // Predicated region
    $region38: #{encoder_forward.1} parent=1 // pred_check
      _
    $region39: #{encoder_forward.1} parent=1 // pred_check_branch
      %63 = sbr.rel (0) target = $region41
    $region40: #{encoder_forward.1} parent=1 // pred_region
      _
    $region41: #{encoder_forward.1} parent=1 // pred_fallthru
      _
    // Predicated region
    $region42: #{encoder_forward.1} parent=1 // pred_check
      _
    $region43: #{encoder_forward.1} parent=1 // pred_check_branch
      %65 = sbr.rel (0) target = $region45
    $region44: #{encoder_forward.1} parent=1 // pred_region
      _
    $region45: #{encoder_forward.1} parent=1 // pred_fallthru
      _
    // Predicated region
    $region46: #{encoder_forward.1} parent=1 // pred_check
      _
    $region47: #{encoder_forward.1} parent=1 // pred_check_branch
      %67 = sbr.rel (0) target = $region49
    $region48: #{encoder_forward.1} parent=1 // pred_region
      _
    $region49: #{encoder_forward.1} parent=1 // pred_fallthru
      _
    // Predicated region
    $region50: #{encoder_forward.1} parent=1 // pred_check
      _
    $region51: #{encoder_forward.1} parent=1 // pred_check_branch
      %69 = sbr.rel (0) target = $region53
    $region52: #{encoder_forward.1} parent=1 // pred_region
      %70 = dma.done [#allocation3], 24576
    $region53: #{encoder_forward.1} parent=1 // pred_fallthru
      _
    // Predicated region
    $region54: #{encoder_forward.1} parent=1 // pred_check
      _
    $region55: #{encoder_forward.1} parent=1 // pred_check_branch
      %72 = sbr.rel (0) target = $region57
    $region56: #{encoder_forward.1} parent=1 // pred_region
      %73 = dma.done [#allocation6], 8192
    $region57: #{encoder_forward.1} parent=1 // pred_fallthru
      _
    %v75 = vld [vmem:[%s0] sm:$0xff]
    %v76 = vld [vmem:[%s0 + $0x8] sm:$0xf]
    %v79 = vcombine.high %v75, %v75
    %v81 = vunpack.c.l.s4 1983009808
    %v82 = vunpack.c.0.s8 %v81
    %v83 = vlaneseq
    %v84 = vshrl.u32 %v83, 7
    %v85 = vsub.s32 %v82, %v84
    %v86 = vrot.slane %v75, %v85
    %v88 = vunpack.c.l.s4 1983009808
    %v89 = vunpack.c.0.s8 %v88
    %v90 = vlaneseq
    %v91 = vshrl.u32 %v90, 7
    %v92 = vsub.s32 %v89, %v91
    %v93 = vrot.slane %v79, %v92
    %v94 = vcombine.high %v86, %v86
    %v95 = vcombine.high %v93, %v93
    %v97 = vunpack.c.l.s4 1983009808
    %v98 = vunpack.c.0.s8 %v97
    %v99 = vlaneseq
    %v100 = vshrl.u32 %v99, 7
    %v101 = vsub.s32 %v98, %v100
    %v102 = vrot.slane %v76, %v101
    %v103 = vcombine.high %v102, %v102
    %v110 = vpack.c.bf16 %v86, %v86
    %v111 = vpack.c.bf16 %v94, %v94
    %v112 = vpack.c.bf16 %v93, %v93
    %v113 = vpack.c.bf16 %v95, %v95
    %v114 = vpack.c.bf16 %v102, %v102
    %v115 = vpack.c.bf16 %v103, %v103
    %v116 = vld [vmem:[#allocation2] sm:$0xff]
    %v117 = vld [vmem:[#allocation2 + $0x8] sm:$0xff]
    %v118 = vld [vmem:[#allocation2 + $0x10] sm:$0xff]
    %v119 = vld [vmem:[#allocation2 + $0x18] sm:$0xff]
    %v120 = vld [vmem:[#allocation2 + $0x20] sm:$0xff]
    %v121 = vld [vmem:[#allocation2 + $0x28] sm:$0xff]
    %v122 = vld [vmem:[#allocation2 + $0x30] sm:$0xff]
    %v123 = vld [vmem:[#allocation2 + $0x38] sm:$0xff]
    %v124 = vld [vmem:[#allocation2 + $0x40] sm:$0xff]
    %v125 = vld [vmem:[#allocation2 + $0x48] sm:$0xff]
    %v126 = vld [vmem:[#allocation2 + $0x50] sm:$0xff]
    %v127 = vld [vmem:[#allocation2 + $0x58] sm:$0xff]
    %v128 = vld [vmem:[#allocation2 + $0x60] sm:$0xff]
    %v129 = vld [vmem:[#allocation2 + $0x68] sm:$0xff]
    %v130 = vld [vmem:[#allocation2 + $0x70] sm:$0xff]
    %v131 = vld [vmem:[#allocation2 + $0x78] sm:$0xff]
    %v132 = vld [vmem:[#allocation2 + $0x80] sm:$0xff]
    %v133 = vld [vmem:[#allocation2 + $0x88] sm:$0xff]
    %v134 = vld [vmem:[#allocation2 + $0x90] sm:$0xff]
    %v135 = vld [vmem:[#allocation2 + $0x98] sm:$0xff]
    %v136 = vld [vmem:[#allocation2 + $0xa0] sm:$0xff]
    %v137 = vld [vmem:[#allocation2 + $0xa8] sm:$0xff]
    %v138 = vld [vmem:[#allocation2 + $0xb0] sm:$0xff]
    %v139 = vld [vmem:[#allocation2 + $0xb8] sm:$0xff]
    %v140 = vld [vmem:[#allocation2 + $0xc0] sm:$0xff]
    %v141 = vld [vmem:[#allocation2 + $0xc8] sm:$0xff]
    %v142 = vld [vmem:[#allocation2 + $0xd0] sm:$0xff]
    %v143 = vld [vmem:[#allocation2 + $0xd8] sm:$0xff]
    %v144 = vld [vmem:[#allocation2 + $0xe0] sm:$0xff]
    %v145 = vld [vmem:[#allocation2 + $0xe8] sm:$0xff]
    %v146 = vld [vmem:[#allocation2 + $0xf0] sm:$0xff]
    %v147 = vld [vmem:[#allocation2 + $0xf8] sm:$0xff]
    %v148 = vld [vmem:[#allocation2 + $0x100] sm:$0xff]
    %v149 = vld [vmem:[#allocation2 + $0x108] sm:$0xff]
    %v150 = vld [vmem:[#allocation2 + $0x110] sm:$0xff]
    %v151 = vld [vmem:[#allocation2 + $0x118] sm:$0xff]
    %v152 = vld [vmem:[#allocation2 + $0x120] sm:$0xff]
    %v153 = vld [vmem:[#allocation2 + $0x128] sm:$0xff]
    %v154 = vld [vmem:[#allocation2 + $0x130] sm:$0xff]
    %v155 = vld [vmem:[#allocation2 + $0x138] sm:$0xff]
    %v156 = vld [vmem:[#allocation2 + $0x140] sm:$0xff]
    %v157 = vld [vmem:[#allocation2 + $0x148] sm:$0xff]
    %v158 = vld [vmem:[#allocation2 + $0x150] sm:$0xff]
    %v159 = vld [vmem:[#allocation2 + $0x158] sm:$0xff]
    %v160 = vld [vmem:[#allocation2 + $0x160] sm:$0xff]
    %v161 = vld [vmem:[#allocation2 + $0x168] sm:$0xff]
    %v162 = vld [vmem:[#allocation2 + $0x170] sm:$0xff]
    %v163 = vld [vmem:[#allocation2 + $0x178] sm:$0xff]
    %v164 = vld [vmem:[#allocation2 + $0x180] sm:$0xff]
    %v165 = vld [vmem:[#allocation2 + $0x188] sm:$0xff]
    %v166 = vld [vmem:[#allocation2 + $0x190] sm:$0xff]
    %v167 = vld [vmem:[#allocation2 + $0x198] sm:$0xff]
    %v168 = vld [vmem:[#allocation2 + $0x1a0] sm:$0xff]
    %v169 = vld [vmem:[#allocation2 + $0x1a8] sm:$0xff]
    %v170 = vld [vmem:[#allocation2 + $0x1b0] sm:$0xff]
    %v171 = vld [vmem:[#allocation2 + $0x1b8] sm:$0xff]
    %v172 = vld [vmem:[#allocation2 + $0x1c0] sm:$0xff]
    %v173 = vld [vmem:[#allocation2 + $0x1c8] sm:$0xff]
    %v174 = vld [vmem:[#allocation2 + $0x1d0] sm:$0xff]
    %v175 = vld [vmem:[#allocation2 + $0x1d8] sm:$0xff]
    %v176 = vld [vmem:[#allocation2 + $0x1e0] sm:$0xff]
    %v177 = vld [vmem:[#allocation2 + $0x1e8] sm:$0xff]
    %v178 = vld [vmem:[#allocation2 + $0x1f0] sm:$0xff]
    %v179 = vld [vmem:[#allocation2 + $0x1f8] sm:$0xff]
    %v180 = vld [vmem:[#allocation2 + $0x200] sm:$0xff]
    %v181 = vld [vmem:[#allocation2 + $0x208] sm:$0xff]
    %v182 = vld [vmem:[#allocation2 + $0x210] sm:$0xff]
    %v183 = vld [vmem:[#allocation2 + $0x218] sm:$0xff]
    %v184 = vld [vmem:[#allocation2 + $0x220] sm:$0xff]
    %v185 = vld [vmem:[#allocation2 + $0x228] sm:$0xff]
    %v186 = vld [vmem:[#allocation2 + $0x230] sm:$0xff]
    %v187 = vld [vmem:[#allocation2 + $0x238] sm:$0xff]
    %v188 = vld [vmem:[#allocation2 + $0x240] sm:$0xff]
    %v189 = vld [vmem:[#allocation2 + $0x248] sm:$0xff]
    %v190 = vld [vmem:[#allocation2 + $0x250] sm:$0xff]
    %v191 = vld [vmem:[#allocation2 + $0x258] sm:$0xff]
    %v192 = vld [vmem:[#allocation2 + $0x260] sm:$0xff]
    %v193 = vld [vmem:[#allocation2 + $0x268] sm:$0xff]
    %v194 = vld [vmem:[#allocation2 + $0x270] sm:$0xff]
    %v195 = vld [vmem:[#allocation2 + $0x278] sm:$0xff]
    %v196 = vld [vmem:[#allocation2 + $0x280] sm:$0xff]
    %v197 = vld [vmem:[#allocation2 + $0x288] sm:$0xff]
    %v198 = vld [vmem:[#allocation2 + $0x290] sm:$0xff]
    %v199 = vld [vmem:[#allocation2 + $0x298] sm:$0xff]
    %v200 = vld [vmem:[#allocation2 + $0x2a0] sm:$0xff]
    %v201 = vld [vmem:[#allocation2 + $0x2a8] sm:$0xff]
    %v202 = vld [vmem:[#allocation2 + $0x2b0] sm:$0xff]
    %v203 = vld [vmem:[#allocation2 + $0x2b8] sm:$0xff]
    %v204 = vld [vmem:[#allocation2 + $0x2c0] sm:$0xff]
    %v205 = vld [vmem:[#allocation2 + $0x2c8] sm:$0xff]
    %v206 = vld [vmem:[#allocation2 + $0x2d0] sm:$0xff]
    %v207 = vld [vmem:[#allocation2 + $0x2d8] sm:$0xff]
    %v208 = vld [vmem:[#allocation2 + $0x2e0] sm:$0xff]
    %v209 = vld [vmem:[#allocation2 + $0x2e8] sm:$0xff]
    %v210 = vld [vmem:[#allocation2 + $0x2f0] sm:$0xff]
    %v211 = vld [vmem:[#allocation2 + $0x2f8] sm:$0xff]
    %v212 = vld [vmem:[#allocation2 + $0x300] sm:$0xff]
    %v213 = vld [vmem:[#allocation2 + $0x308] sm:$0xff]
    %v214 = vld [vmem:[#allocation2 + $0x310] sm:$0xff]
    %v215 = vld [vmem:[#allocation2 + $0x318] sm:$0xff]
    %v216 = vld [vmem:[#allocation2 + $0x320] sm:$0xff]
    %v217 = vld [vmem:[#allocation2 + $0x328] sm:$0xff]
    %v218 = vld [vmem:[#allocation2 + $0x330] sm:$0xff]
    %v219 = vld [vmem:[#allocation2 + $0x338] sm:$0xff]
    %v220 = vld [vmem:[#allocation2 + $0x340] sm:$0xff]
    %v221 = vld [vmem:[#allocation2 + $0x348] sm:$0xff]
    %v222 = vld [vmem:[#allocation2 + $0x350] sm:$0xff]
    %v223 = vld [vmem:[#allocation2 + $0x358] sm:$0xff]
    %v224 = vld [vmem:[#allocation2 + $0x360] sm:$0xff]
    %v225 = vld [vmem:[#allocation2 + $0x368] sm:$0xff]
    %v226 = vld [vmem:[#allocation2 + $0x370] sm:$0xff]
    %v227 = vld [vmem:[#allocation2 + $0x378] sm:$0xff]
    %v228 = vld [vmem:[#allocation2 + $0x380] sm:$0xff]
    %v229 = vld [vmem:[#allocation2 + $0x388] sm:$0xff]
    %v230 = vld [vmem:[#allocation2 + $0x390] sm:$0xff]
    %v231 = vld [vmem:[#allocation2 + $0x398] sm:$0xff]
    %v232 = vld [vmem:[#allocation2 + $0x3a0] sm:$0xff]
    %v233 = vld [vmem:[#allocation2 + $0x3a8] sm:$0xff]
    %v234 = vld [vmem:[#allocation2 + $0x3b0] sm:$0xff]
    %v235 = vld [vmem:[#allocation2 + $0x3b8] sm:$0xff]
    %v236 = vld [vmem:[#allocation2 + $0x3c0] sm:$0xff]
    %v237 = vld [vmem:[#allocation2 + $0x3c8] sm:$0xff]
    %v238 = vld [vmem:[#allocation2 + $0x3d0] sm:$0xff]
    %v239 = vld [vmem:[#allocation2 + $0x3d8] sm:$0xff]
    %v240 = vld [vmem:[#allocation2 + $0x3e0] sm:$0xff]
    %v241 = vld [vmem:[#allocation2 + $0x3e8] sm:$0xff]
    %v242 = vld [vmem:[#allocation2 + $0x3f0] sm:$0xff]
    %v243 = vld [vmem:[#allocation2 + $0x3f8] sm:$0xff]
    %v244 = vld [vmem:[#allocation2 + $0x400] sm:$0xff]
    %v245 = vld [vmem:[#allocation2 + $0x408] sm:$0xff]
    %v246 = vld [vmem:[#allocation2 + $0x410] sm:$0xff]
    %v247 = vld [vmem:[#allocation2 + $0x418] sm:$0xff]
    %v248 = vld [vmem:[#allocation2 + $0x420] sm:$0xff]
    %v249 = vld [vmem:[#allocation2 + $0x428] sm:$0xff]
    %v250 = vld [vmem:[#allocation2 + $0x430] sm:$0xff]
    %v251 = vld [vmem:[#allocation2 + $0x438] sm:$0xff]
    %v252 = vld [vmem:[#allocation2 + $0x440] sm:$0xff]
    %v253 = vld [vmem:[#allocation2 + $0x448] sm:$0xff]
    %v254 = vld [vmem:[#allocation2 + $0x450] sm:$0xff]
    %v255 = vld [vmem:[#allocation2 + $0x458] sm:$0xff]
    %v256 = vld [vmem:[#allocation2 + $0x460] sm:$0xff]
    %v257 = vld [vmem:[#allocation2 + $0x468] sm:$0xff]
    %v258 = vld [vmem:[#allocation2 + $0x470] sm:$0xff]
    %v259 = vld [vmem:[#allocation2 + $0x478] sm:$0xff]
    %v260 = vld [vmem:[#allocation2 + $0x480] sm:$0xff]
    %v261 = vld [vmem:[#allocation2 + $0x488] sm:$0xff]
    %v262 = vld [vmem:[#allocation2 + $0x490] sm:$0xff]
    %v263 = vld [vmem:[#allocation2 + $0x498] sm:$0xff]
    %v264 = vld [vmem:[#allocation2 + $0x4a0] sm:$0xff]
    %v265 = vld [vmem:[#allocation2 + $0x4a8] sm:$0xff]
    %v266 = vld [vmem:[#allocation2 + $0x4b0] sm:$0xff]
    %v267 = vld [vmem:[#allocation2 + $0x4b8] sm:$0xff]
    %v268 = vld [vmem:[#allocation2 + $0x4c0] sm:$0xff]
    %v269 = vld [vmem:[#allocation2 + $0x4c8] sm:$0xff]
    %v270 = vld [vmem:[#allocation2 + $0x4d0] sm:$0xff]
    %v271 = vld [vmem:[#allocation2 + $0x4d8] sm:$0xff]
    %v272 = vld [vmem:[#allocation2 + $0x4e0] sm:$0xff]
    %v273 = vld [vmem:[#allocation2 + $0x4e8] sm:$0xff]
    %v274 = vld [vmem:[#allocation2 + $0x4f0] sm:$0xff]
    %v275 = vld [vmem:[#allocation2 + $0x4f8] sm:$0xff]
    %v276 = vld [vmem:[#allocation2 + $0x500] sm:$0xff]
    %v277 = vld [vmem:[#allocation2 + $0x508] sm:$0xff]
    %v278 = vld [vmem:[#allocation2 + $0x510] sm:$0xff]
    %v279 = vld [vmem:[#allocation2 + $0x518] sm:$0xff]
    %v280 = vld [vmem:[#allocation2 + $0x520] sm:$0xff]
    %v281 = vld [vmem:[#allocation2 + $0x528] sm:$0xff]
    %v282 = vld [vmem:[#allocation2 + $0x530] sm:$0xff]
    %v283 = vld [vmem:[#allocation2 + $0x538] sm:$0xff]
    %v284 = vld [vmem:[#allocation2 + $0x540] sm:$0xff]
    %v285 = vld [vmem:[#allocation2 + $0x548] sm:$0xff]
    %v286 = vld [vmem:[#allocation2 + $0x550] sm:$0xff]
    %v287 = vld [vmem:[#allocation2 + $0x558] sm:$0xff]
    %v288 = vld [vmem:[#allocation2 + $0x560] sm:$0xff]
    %v289 = vld [vmem:[#allocation2 + $0x568] sm:$0xff]
    %v290 = vld [vmem:[#allocation2 + $0x570] sm:$0xff]
    %v291 = vld [vmem:[#allocation2 + $0x578] sm:$0xff]
    %v292 = vld [vmem:[#allocation2 + $0x580] sm:$0xff]
    %v293 = vld [vmem:[#allocation2 + $0x588] sm:$0xff]
    %v294 = vld [vmem:[#allocation2 + $0x590] sm:$0xff]
    %v295 = vld [vmem:[#allocation2 + $0x598] sm:$0xff]
    %v296 = vld [vmem:[#allocation2 + $0x5a0] sm:$0xff]
    %v297 = vld [vmem:[#allocation2 + $0x5a8] sm:$0xff]
    %v298 = vld [vmem:[#allocation2 + $0x5b0] sm:$0xff]
    %v299 = vld [vmem:[#allocation2 + $0x5b8] sm:$0xff]
    %v300 = vld [vmem:[#allocation2 + $0x5c0] sm:$0xff]
    %v301 = vld [vmem:[#allocation2 + $0x5c8] sm:$0xff]
    %v302 = vld [vmem:[#allocation2 + $0x5d0] sm:$0xff]
    %v303 = vld [vmem:[#allocation2 + $0x5d8] sm:$0xff]
    %v304 = vld [vmem:[#allocation2 + $0x5e0] sm:$0xff]
    %v305 = vld [vmem:[#allocation2 + $0x5e8] sm:$0xff]
    %v306 = vld [vmem:[#allocation2 + $0x5f0] sm:$0xff]
    %v307 = vld [vmem:[#allocation2 + $0x5f8] sm:$0xff]
    %v308 = vld [vmem:[%s2] sm:$0xf]
    %v310 = vlaneseq
    %v311 = vshrl.u32 %v310, 7
    %v312 = vsub.s32 0, %v311
    %v313 = vrot.slane %v308, %v312
    %v314 = vlaneseq
    %v315 = vshrl.u32 %v314, 7
    %v316 = vsub.s32 1, %v315
    %v317 = vrot.slane %v308, %v316
    %v318 = vlaneseq
    %v319 = vshrl.u32 %v318, 7
    %v320 = vsub.s32 2, %v319
    %v321 = vrot.slane %v308, %v320
    %v322 = vlaneseq
    %v323 = vshrl.u32 %v322, 7
    %v324 = vsub.s32 3, %v323
    %v325 = vrot.slane %v308, %v324
    %v522 = vunpack.c.l.b16 %v116
    %v523 = vunpack.c.h.b16 %v116
    %v524 = vunpack.c.l.b16 %v117
    %v525 = vunpack.c.h.b16 %v117
    %v526 = vunpack.c.l.b16 %v118
    %v527 = vunpack.c.h.b16 %v118
    %v528 = vunpack.c.l.b16 %v119
    %v529 = vunpack.c.h.b16 %v119
    %v530 = vunpack.c.l.b16 %v120
    %v531 = vunpack.c.h.b16 %v120
    %v532 = vunpack.c.l.b16 %v121
    %v533 = vunpack.c.h.b16 %v121
    %v534 = vunpack.c.l.b16 %v122
    %v535 = vunpack.c.h.b16 %v122
    %v536 = vunpack.c.l.b16 %v123
    %v537 = vunpack.c.h.b16 %v123
    %v538 = vunpack.c.l.b16 %v124
    %v539 = vunpack.c.h.b16 %v124
    %v540 = vunpack.c.l.b16 %v125
    %v541 = vunpack.c.h.b16 %v125
    %v542 = vunpack.c.l.b16 %v126
    %v543 = vunpack.c.h.b16 %v126
    %v544 = vunpack.c.l.b16 %v127
    %v545 = vunpack.c.h.b16 %v127
    %v546 = vunpack.c.l.b16 %v128
    %v547 = vunpack.c.h.b16 %v128
    %v548 = vunpack.c.l.b16 %v129
    %v549 = vunpack.c.h.b16 %v129
    %v550 = vunpack.c.l.b16 %v130
    %v551 = vunpack.c.h.b16 %v130
    %v552 = vunpack.c.l.b16 %v131
    %v553 = vunpack.c.h.b16 %v131
    %v554 = vunpack.c.l.b16 %v132
    %v555 = vunpack.c.h.b16 %v132
    %v556 = vunpack.c.l.b16 %v133
    %v557 = vunpack.c.h.b16 %v133
    %v558 = vunpack.c.l.b16 %v134
    %v559 = vunpack.c.h.b16 %v134
    %v560 = vunpack.c.l.b16 %v135
    %v561 = vunpack.c.h.b16 %v135
    %v562 = vunpack.c.l.b16 %v136
    %v563 = vunpack.c.h.b16 %v136
    %v564 = vunpack.c.l.b16 %v137
    %v565 = vunpack.c.h.b16 %v137
    %v566 = vunpack.c.l.b16 %v138
    %v567 = vunpack.c.h.b16 %v138
    %v568 = vunpack.c.l.b16 %v139
    %v569 = vunpack.c.h.b16 %v139
    %v570 = vunpack.c.l.b16 %v140
    %v571 = vunpack.c.h.b16 %v140
    %v572 = vunpack.c.l.b16 %v141
    %v573 = vunpack.c.h.b16 %v141
    %v574 = vunpack.c.l.b16 %v142
    %v575 = vunpack.c.h.b16 %v142
    %v576 = vunpack.c.l.b16 %v143
    %v577 = vunpack.c.h.b16 %v143
    %v578 = vunpack.c.l.b16 %v144
    %v579 = vunpack.c.h.b16 %v144
    %v580 = vunpack.c.l.b16 %v145
    %v581 = vunpack.c.h.b16 %v145
    %v582 = vunpack.c.l.b16 %v146
    %v583 = vunpack.c.h.b16 %v146
    %v584 = vunpack.c.l.b16 %v147
    %v585 = vunpack.c.h.b16 %v147
    %v586 = vunpack.c.l.b16 %v148
    %v587 = vunpack.c.h.b16 %v148
    %v588 = vunpack.c.l.b16 %v149
    %v589 = vunpack.c.h.b16 %v149
    %v590 = vunpack.c.l.b16 %v150
    %v591 = vunpack.c.h.b16 %v150
    %v592 = vunpack.c.l.b16 %v151
    %v593 = vunpack.c.h.b16 %v151
    %v594 = vunpack.c.l.b16 %v152
    %v595 = vunpack.c.h.b16 %v152
    %v596 = vunpack.c.l.b16 %v153
    %v597 = vunpack.c.h.b16 %v153
    %v598 = vunpack.c.l.b16 %v154
    %v599 = vunpack.c.h.b16 %v154
    %v600 = vunpack.c.l.b16 %v155
    %v601 = vunpack.c.h.b16 %v155
    %v602 = vunpack.c.l.b16 %v156
    %v603 = vunpack.c.h.b16 %v156
    %v604 = vunpack.c.l.b16 %v157
    %v605 = vunpack.c.h.b16 %v157
    %v606 = vunpack.c.l.b16 %v158
    %v607 = vunpack.c.h.b16 %v158
    %v608 = vunpack.c.l.b16 %v159
    %v609 = vunpack.c.h.b16 %v159
    %v610 = vunpack.c.l.b16 %v160
    %v611 = vunpack.c.h.b16 %v160
    %v612 = vunpack.c.l.b16 %v161
    %v613 = vunpack.c.h.b16 %v161
    %v614 = vunpack.c.l.b16 %v162
    %v615 = vunpack.c.h.b16 %v162
    %v616 = vunpack.c.l.b16 %v163
    %v617 = vunpack.c.h.b16 %v163
    %v618 = vunpack.c.l.b16 %v164
    %v619 = vunpack.c.h.b16 %v164
    %v620 = vunpack.c.l.b16 %v165
    %v621 = vunpack.c.h.b16 %v165
    %v622 = vunpack.c.l.b16 %v166
    %v623 = vunpack.c.h.b16 %v166
    %v624 = vunpack.c.l.b16 %v167
    %v625 = vunpack.c.h.b16 %v167
    %v626 = vunpack.c.l.b16 %v168
    %v627 = vunpack.c.h.b16 %v168
    %v628 = vunpack.c.l.b16 %v169
    %v629 = vunpack.c.h.b16 %v169
    %v630 = vunpack.c.l.b16 %v170
    %v631 = vunpack.c.h.b16 %v170
    %v632 = vunpack.c.l.b16 %v171
    %v633 = vunpack.c.h.b16 %v171
    %v634 = vunpack.c.l.b16 %v172
    %v635 = vunpack.c.h.b16 %v172
    %v636 = vunpack.c.l.b16 %v173
    %v637 = vunpack.c.h.b16 %v173
    %v638 = vunpack.c.l.b16 %v174
    %v639 = vunpack.c.h.b16 %v174
    %v640 = vunpack.c.l.b16 %v175
    %v641 = vunpack.c.h.b16 %v175
    %v642 = vunpack.c.l.b16 %v176
    %v643 = vunpack.c.h.b16 %v176
    %v644 = vunpack.c.l.b16 %v177
    %v645 = vunpack.c.h.b16 %v177
    %v646 = vunpack.c.l.b16 %v178
    %v647 = vunpack.c.h.b16 %v178
    %v648 = vunpack.c.l.b16 %v179
    %v649 = vunpack.c.h.b16 %v179
    %v650 = vunpack.c.l.b16 %v180
    %v651 = vunpack.c.h.b16 %v180
    %v652 = vunpack.c.l.b16 %v181
    %v653 = vunpack.c.h.b16 %v181
    %v654 = vunpack.c.l.b16 %v182
    %v655 = vunpack.c.h.b16 %v182
    %v656 = vunpack.c.l.b16 %v183
    %v657 = vunpack.c.h.b16 %v183
    %v658 = vunpack.c.l.b16 %v184
    %v659 = vunpack.c.h.b16 %v184
    %v660 = vunpack.c.l.b16 %v185
    %v661 = vunpack.c.h.b16 %v185
    %v662 = vunpack.c.l.b16 %v186
    %v663 = vunpack.c.h.b16 %v186
    %v664 = vunpack.c.l.b16 %v187
    %v665 = vunpack.c.h.b16 %v187
    %v666 = vunpack.c.l.b16 %v188
    %v667 = vunpack.c.h.b16 %v188
    %v668 = vunpack.c.l.b16 %v189
    %v669 = vunpack.c.h.b16 %v189
    %v670 = vunpack.c.l.b16 %v190
    %v671 = vunpack.c.h.b16 %v190
    %v672 = vunpack.c.l.b16 %v191
    %v673 = vunpack.c.h.b16 %v191
    %v674 = vunpack.c.l.b16 %v192
    %v675 = vunpack.c.h.b16 %v192
    %v676 = vunpack.c.l.b16 %v193
    %v677 = vunpack.c.h.b16 %v193
    %v678 = vunpack.c.l.b16 %v194
    %v679 = vunpack.c.h.b16 %v194
    %v680 = vunpack.c.l.b16 %v195
    %v681 = vunpack.c.h.b16 %v195
    %v682 = vunpack.c.l.b16 %v196
    %v683 = vunpack.c.h.b16 %v196
    %v684 = vunpack.c.l.b16 %v197
    %v685 = vunpack.c.h.b16 %v197
    %v686 = vunpack.c.l.b16 %v198
    %v687 = vunpack.c.h.b16 %v198
    %v688 = vunpack.c.l.b16 %v199
    %v689 = vunpack.c.h.b16 %v199
    %v690 = vunpack.c.l.b16 %v200
    %v691 = vunpack.c.h.b16 %v200
    %v692 = vunpack.c.l.b16 %v201
    %v693 = vunpack.c.h.b16 %v201
    %v694 = vunpack.c.l.b16 %v202
    %v695 = vunpack.c.h.b16 %v202
    %v696 = vunpack.c.l.b16 %v203
    %v697 = vunpack.c.h.b16 %v203
    %v698 = vunpack.c.l.b16 %v204
    %v699 = vunpack.c.h.b16 %v204
    %v700 = vunpack.c.l.b16 %v205
    %v701 = vunpack.c.h.b16 %v205
    %v702 = vunpack.c.l.b16 %v206
    %v703 = vunpack.c.h.b16 %v206
    %v704 = vunpack.c.l.b16 %v207
    %v705 = vunpack.c.h.b16 %v207
    %v706 = vunpack.c.l.b16 %v208
    %v707 = vunpack.c.h.b16 %v208
    %v708 = vunpack.c.l.b16 %v209
    %v709 = vunpack.c.h.b16 %v209
    %v710 = vunpack.c.l.b16 %v210
    %v711 = vunpack.c.h.b16 %v210
    %v712 = vunpack.c.l.b16 %v211
    %v713 = vunpack.c.h.b16 %v211
    %v714 = vunpack.c.l.b16 %v212
    %v715 = vunpack.c.h.b16 %v212
    %v716 = vunpack.c.l.b16 %v213
    %v717 = vunpack.c.h.b16 %v213
    %v718 = vunpack.c.l.b16 %v214
    %v719 = vunpack.c.h.b16 %v214
    %v720 = vunpack.c.l.b16 %v215
    %v721 = vunpack.c.h.b16 %v215
    %v722 = vunpack.c.l.b16 %v216
    %v723 = vunpack.c.h.b16 %v216
    %v724 = vunpack.c.l.b16 %v217
    %v725 = vunpack.c.h.b16 %v217
    %v726 = vunpack.c.l.b16 %v218
    %v727 = vunpack.c.h.b16 %v218
    %v728 = vunpack.c.l.b16 %v219
    %v729 = vunpack.c.h.b16 %v219
    %v730 = vunpack.c.l.b16 %v220
    %v731 = vunpack.c.h.b16 %v220
    %v732 = vunpack.c.l.b16 %v221
    %v733 = vunpack.c.h.b16 %v221
    %v734 = vunpack.c.l.b16 %v222
    %v735 = vunpack.c.h.b16 %v222
    %v736 = vunpack.c.l.b16 %v223
    %v737 = vunpack.c.h.b16 %v223
    %v738 = vunpack.c.l.b16 %v224
    %v739 = vunpack.c.h.b16 %v224
    %v740 = vunpack.c.l.b16 %v225
    %v741 = vunpack.c.h.b16 %v225
    %v742 = vunpack.c.l.b16 %v226
    %v743 = vunpack.c.h.b16 %v226
    %v744 = vunpack.c.l.b16 %v227
    %v745 = vunpack.c.h.b16 %v227
    %v746 = vunpack.c.l.b16 %v228
    %v747 = vunpack.c.h.b16 %v228
    %v748 = vunpack.c.l.b16 %v229
    %v749 = vunpack.c.h.b16 %v229
    %v750 = vunpack.c.l.b16 %v230
    %v751 = vunpack.c.h.b16 %v230
    %v752 = vunpack.c.l.b16 %v231
    %v753 = vunpack.c.h.b16 %v231
    %v754 = vunpack.c.l.b16 %v232
    %v755 = vunpack.c.h.b16 %v232
    %v756 = vunpack.c.l.b16 %v233
    %v757 = vunpack.c.h.b16 %v233
    %v758 = vunpack.c.l.b16 %v234
    %v759 = vunpack.c.h.b16 %v234
    %v760 = vunpack.c.l.b16 %v235
    %v761 = vunpack.c.h.b16 %v235
    %v762 = vunpack.c.l.b16 %v236
    %v763 = vunpack.c.h.b16 %v236
    %v764 = vunpack.c.l.b16 %v237
    %v765 = vunpack.c.h.b16 %v237
    %v766 = vunpack.c.l.b16 %v238
    %v767 = vunpack.c.h.b16 %v238
    %v768 = vunpack.c.l.b16 %v239
    %v769 = vunpack.c.h.b16 %v239
    %v770 = vunpack.c.l.b16 %v240
    %v771 = vunpack.c.h.b16 %v240
    %v772 = vunpack.c.l.b16 %v241
    %v773 = vunpack.c.h.b16 %v241
    %v774 = vunpack.c.l.b16 %v242
    %v775 = vunpack.c.h.b16 %v242
    %v776 = vunpack.c.l.b16 %v243
    %v777 = vunpack.c.h.b16 %v243
    %v778 = vunpack.c.l.b16 %v244
    %v779 = vunpack.c.h.b16 %v244
    %v780 = vunpack.c.l.b16 %v245
    %v781 = vunpack.c.h.b16 %v245
    %v782 = vunpack.c.l.b16 %v246
    %v783 = vunpack.c.h.b16 %v246
    %v784 = vunpack.c.l.b16 %v247
    %v785 = vunpack.c.h.b16 %v247
    %v786 = vunpack.c.l.b16 %v248
    %v787 = vunpack.c.h.b16 %v248
    %v788 = vunpack.c.l.b16 %v249
    %v789 = vunpack.c.h.b16 %v249
    %v790 = vunpack.c.l.b16 %v250
    %v791 = vunpack.c.h.b16 %v250
    %v792 = vunpack.c.l.b16 %v251
    %v793 = vunpack.c.h.b16 %v251
    %v794 = vunpack.c.l.b16 %v252
    %v795 = vunpack.c.h.b16 %v252
    %v796 = vunpack.c.l.b16 %v253
    %v797 = vunpack.c.h.b16 %v253
    %v798 = vunpack.c.l.b16 %v254
    %v799 = vunpack.c.h.b16 %v254
    %v800 = vunpack.c.l.b16 %v255
    %v801 = vunpack.c.h.b16 %v255
    %v802 = vunpack.c.l.b16 %v256
    %v803 = vunpack.c.h.b16 %v256
    %v804 = vunpack.c.l.b16 %v257
    %v805 = vunpack.c.h.b16 %v257
    %v806 = vunpack.c.l.b16 %v258
    %v807 = vunpack.c.h.b16 %v258
    %v808 = vunpack.c.l.b16 %v259
    %v809 = vunpack.c.h.b16 %v259
    %v810 = vunpack.c.l.b16 %v260
    %v811 = vunpack.c.h.b16 %v260
    %v812 = vunpack.c.l.b16 %v261
    %v813 = vunpack.c.h.b16 %v261
    %v814 = vunpack.c.l.b16 %v262
    %v815 = vunpack.c.h.b16 %v262
    %v816 = vunpack.c.l.b16 %v263
    %v817 = vunpack.c.h.b16 %v263
    %v818 = vunpack.c.l.b16 %v264
    %v819 = vunpack.c.h.b16 %v264
    %v820 = vunpack.c.l.b16 %v265
    %v821 = vunpack.c.h.b16 %v265
    %v822 = vunpack.c.l.b16 %v266
    %v823 = vunpack.c.h.b16 %v266
    %v824 = vunpack.c.l.b16 %v267
    %v825 = vunpack.c.h.b16 %v267
    %v826 = vunpack.c.l.b16 %v268
    %v827 = vunpack.c.h.b16 %v268
    %v828 = vunpack.c.l.b16 %v269
    %v829 = vunpack.c.h.b16 %v269
    %v830 = vunpack.c.l.b16 %v270
    %v831 = vunpack.c.h.b16 %v270
    %v832 = vunpack.c.l.b16 %v271
    %v833 = vunpack.c.h.b16 %v271
    %v834 = vunpack.c.l.b16 %v272
    %v835 = vunpack.c.h.b16 %v272
    %v836 = vunpack.c.l.b16 %v273
    %v837 = vunpack.c.h.b16 %v273
    %v838 = vunpack.c.l.b16 %v274
    %v839 = vunpack.c.h.b16 %v274
    %v840 = vunpack.c.l.b16 %v275
    %v841 = vunpack.c.h.b16 %v275
    %v842 = vunpack.c.l.b16 %v276
    %v843 = vunpack.c.h.b16 %v276
    %v844 = vunpack.c.l.b16 %v277
    %v845 = vunpack.c.h.b16 %v277
    %v846 = vunpack.c.l.b16 %v278
    %v847 = vunpack.c.h.b16 %v278
    %v848 = vunpack.c.l.b16 %v279
    %v849 = vunpack.c.h.b16 %v279
    %v850 = vunpack.c.l.b16 %v280
    %v851 = vunpack.c.h.b16 %v280
    %v852 = vunpack.c.l.b16 %v281
    %v853 = vunpack.c.h.b16 %v281
    %v854 = vunpack.c.l.b16 %v282
    %v855 = vunpack.c.h.b16 %v282
    %v856 = vunpack.c.l.b16 %v283
    %v857 = vunpack.c.h.b16 %v283
    %v858 = vunpack.c.l.b16 %v284
    %v859 = vunpack.c.h.b16 %v284
    %v860 = vunpack.c.l.b16 %v285
    %v861 = vunpack.c.h.b16 %v285
    %v862 = vunpack.c.l.b16 %v286
    %v863 = vunpack.c.h.b16 %v286
    %v864 = vunpack.c.l.b16 %v287
    %v865 = vunpack.c.h.b16 %v287
    %v866 = vunpack.c.l.b16 %v288
    %v867 = vunpack.c.h.b16 %v288
    %v868 = vunpack.c.l.b16 %v289
    %v869 = vunpack.c.h.b16 %v289
    %v870 = vunpack.c.l.b16 %v290
    %v871 = vunpack.c.h.b16 %v290
    %v872 = vunpack.c.l.b16 %v291
    %v873 = vunpack.c.h.b16 %v291
    %v874 = vunpack.c.l.b16 %v292
    %v875 = vunpack.c.h.b16 %v292
    %v876 = vunpack.c.l.b16 %v293
    %v877 = vunpack.c.h.b16 %v293
    %v878 = vunpack.c.l.b16 %v294
    %v879 = vunpack.c.h.b16 %v294
    %v880 = vunpack.c.l.b16 %v295
    %v881 = vunpack.c.h.b16 %v295
    %v882 = vunpack.c.l.b16 %v296
    %v883 = vunpack.c.h.b16 %v296
    %v884 = vunpack.c.l.b16 %v297
    %v885 = vunpack.c.h.b16 %v297
    %v886 = vunpack.c.l.b16 %v298
    %v887 = vunpack.c.h.b16 %v298
    %v888 = vunpack.c.l.b16 %v299
    %v889 = vunpack.c.h.b16 %v299
    %v890 = vunpack.c.l.b16 %v300
    %v891 = vunpack.c.h.b16 %v300
    %v892 = vunpack.c.l.b16 %v301
    %v893 = vunpack.c.h.b16 %v301
    %v894 = vunpack.c.l.b16 %v302
    %v895 = vunpack.c.h.b16 %v302
    %v896 = vunpack.c.l.b16 %v303
    %v897 = vunpack.c.h.b16 %v303
    %v898 = vunpack.c.l.b16 %v304
    %v899 = vunpack.c.h.b16 %v304
    %v900 = vunpack.c.l.b16 %v305
    %v901 = vunpack.c.h.b16 %v305
    %v902 = vunpack.c.l.b16 %v306
    %v903 = vunpack.c.h.b16 %v306
    %v904 = vunpack.c.l.b16 %v307
    %v905 = vunpack.c.h.b16 %v307
    %v906 = vpack.c.b16 %v526, %v522
    %v907 = vpack.c.b16 %v527, %v523
    %v908 = vpack.c.b16 %v528, %v524
    %v909 = vpack.c.b16 %v529, %v525
    %v910 = vpack.c.b16 %v534, %v530
    %v911 = vpack.c.b16 %v535, %v531
    %v912 = vpack.c.b16 %v536, %v532
    %v913 = vpack.c.b16 %v537, %v533
    %v914 = vpack.c.b16 %v542, %v538
    %v915 = vpack.c.b16 %v543, %v539
    %v916 = vpack.c.b16 %v544, %v540
    %v917 = vpack.c.b16 %v545, %v541
    %v918 = vpack.c.b16 %v550, %v546
    %v919 = vpack.c.b16 %v551, %v547
    %v920 = vpack.c.b16 %v552, %v548
    %v921 = vpack.c.b16 %v553, %v549
    %v922 = vpack.c.b16 %v558, %v554
    %v923 = vpack.c.b16 %v559, %v555
    %v924 = vpack.c.b16 %v560, %v556
    %v925 = vpack.c.b16 %v561, %v557
    %v926 = vpack.c.b16 %v566, %v562
    %v927 = vpack.c.b16 %v567, %v563
    %v928 = vpack.c.b16 %v568, %v564
    %v929 = vpack.c.b16 %v569, %v565
    %v930 = vpack.c.b16 %v574, %v570
    %v931 = vpack.c.b16 %v575, %v571
    %v932 = vpack.c.b16 %v576, %v572
    %v933 = vpack.c.b16 %v577, %v573
    %v934 = vpack.c.b16 %v582, %v578
    %v935 = vpack.c.b16 %v583, %v579
    %v936 = vpack.c.b16 %v584, %v580
    %v937 = vpack.c.b16 %v585, %v581
    %v938 = vpack.c.b16 %v590, %v586
    %v939 = vpack.c.b16 %v591, %v587
    %v940 = vpack.c.b16 %v592, %v588
    %v941 = vpack.c.b16 %v593, %v589
    %v942 = vpack.c.b16 %v598, %v594
    %v943 = vpack.c.b16 %v599, %v595
    %v944 = vpack.c.b16 %v600, %v596
    %v945 = vpack.c.b16 %v601, %v597
    %v946 = vpack.c.b16 %v606, %v602
    %v947 = vpack.c.b16 %v607, %v603
    %v948 = vpack.c.b16 %v608, %v604
    %v949 = vpack.c.b16 %v609, %v605
    %v950 = vpack.c.b16 %v614, %v610
    %v951 = vpack.c.b16 %v615, %v611
    %v952 = vpack.c.b16 %v616, %v612
    %v953 = vpack.c.b16 %v617, %v613
    %v954 = vpack.c.b16 %v622, %v618
    %v955 = vpack.c.b16 %v623, %v619
    %v956 = vpack.c.b16 %v624, %v620
    %v957 = vpack.c.b16 %v625, %v621
    %v958 = vpack.c.b16 %v630, %v626
    %v959 = vpack.c.b16 %v631, %v627
    %v960 = vpack.c.b16 %v632, %v628
    %v961 = vpack.c.b16 %v633, %v629
    %v962 = vpack.c.b16 %v638, %v634
    %v963 = vpack.c.b16 %v639, %v635
    %v964 = vpack.c.b16 %v640, %v636
    %v965 = vpack.c.b16 %v641, %v637
    %v966 = vpack.c.b16 %v646, %v642
    %v967 = vpack.c.b16 %v647, %v643
    %v968 = vpack.c.b16 %v648, %v644
    %v969 = vpack.c.b16 %v649, %v645
    %v970 = vpack.c.b16 %v654, %v650
    %v971 = vpack.c.b16 %v655, %v651
    %v972 = vpack.c.b16 %v656, %v652
    %v973 = vpack.c.b16 %v657, %v653
    %v974 = vpack.c.b16 %v662, %v658
    %v975 = vpack.c.b16 %v663, %v659
    %v976 = vpack.c.b16 %v664, %v660
    %v977 = vpack.c.b16 %v665, %v661
    %v978 = vpack.c.b16 %v670, %v666
    %v979 = vpack.c.b16 %v671, %v667
    %v980 = vpack.c.b16 %v672, %v668
    %v981 = vpack.c.b16 %v673, %v669
    %v982 = vpack.c.b16 %v678, %v674
    %v983 = vpack.c.b16 %v679, %v675
    %v984 = vpack.c.b16 %v680, %v676
    %v985 = vpack.c.b16 %v681, %v677
    %v986 = vpack.c.b16 %v686, %v682
    %v987 = vpack.c.b16 %v687, %v683
    %v988 = vpack.c.b16 %v688, %v684
    %v989 = vpack.c.b16 %v689, %v685
    %v990 = vpack.c.b16 %v694, %v690
    %v991 = vpack.c.b16 %v695, %v691
    %v992 = vpack.c.b16 %v696, %v692
    %v993 = vpack.c.b16 %v697, %v693
    %v994 = vpack.c.b16 %v702, %v698
    %v995 = vpack.c.b16 %v703, %v699
    %v996 = vpack.c.b16 %v704, %v700
    %v997 = vpack.c.b16 %v705, %v701
    %v998 = vpack.c.b16 %v710, %v706
    %v999 = vpack.c.b16 %v711, %v707
    %v1000 = vpack.c.b16 %v712, %v708
    %v1001 = vpack.c.b16 %v713, %v709
    %v1002 = vpack.c.b16 %v718, %v714
    %v1003 = vpack.c.b16 %v719, %v715
    %v1004 = vpack.c.b16 %v720, %v716
    %v1005 = vpack.c.b16 %v721, %v717
    %v1006 = vpack.c.b16 %v726, %v722
    %v1007 = vpack.c.b16 %v727, %v723
    %v1008 = vpack.c.b16 %v728, %v724
    %v1009 = vpack.c.b16 %v729, %v725
    %v1010 = vpack.c.b16 %v734, %v730
    %v1011 = vpack.c.b16 %v735, %v731
    %v1012 = vpack.c.b16 %v736, %v732
    %v1013 = vpack.c.b16 %v737, %v733
    %v1014 = vpack.c.b16 %v742, %v738
    %v1015 = vpack.c.b16 %v743, %v739
    %v1016 = vpack.c.b16 %v744, %v740
    %v1017 = vpack.c.b16 %v745, %v741
    %v1018 = vpack.c.b16 %v750, %v746
    %v1019 = vpack.c.b16 %v751, %v747
    %v1020 = vpack.c.b16 %v752, %v748
    %v1021 = vpack.c.b16 %v753, %v749
    %v1022 = vpack.c.b16 %v758, %v754
    %v1023 = vpack.c.b16 %v759, %v755
    %v1024 = vpack.c.b16 %v760, %v756
    %v1025 = vpack.c.b16 %v761, %v757
    %v1026 = vpack.c.b16 %v766, %v762
    %v1027 = vpack.c.b16 %v767, %v763
    %v1028 = vpack.c.b16 %v768, %v764
    %v1029 = vpack.c.b16 %v769, %v765
    %v1030 = vpack.c.b16 %v774, %v770
    %v1031 = vpack.c.b16 %v775, %v771
    %v1032 = vpack.c.b16 %v776, %v772
    %v1033 = vpack.c.b16 %v777, %v773
    %v1034 = vpack.c.b16 %v782, %v778
    %v1035 = vpack.c.b16 %v783, %v779
    %v1036 = vpack.c.b16 %v784, %v780
    %v1037 = vpack.c.b16 %v785, %v781
    %v1038 = vpack.c.b16 %v790, %v786
    %v1039 = vpack.c.b16 %v791, %v787
    %v1040 = vpack.c.b16 %v792, %v788
    %v1041 = vpack.c.b16 %v793, %v789
    %v1042 = vpack.c.b16 %v798, %v794
    %v1043 = vpack.c.b16 %v799, %v795
    %v1044 = vpack.c.b16 %v800, %v796
    %v1045 = vpack.c.b16 %v801, %v797
    %v1046 = vpack.c.b16 %v806, %v802
    %v1047 = vpack.c.b16 %v807, %v803
    %v1048 = vpack.c.b16 %v808, %v804
    %v1049 = vpack.c.b16 %v809, %v805
    %v1050 = vpack.c.b16 %v814, %v810
    %v1051 = vpack.c.b16 %v815, %v811
    %v1052 = vpack.c.b16 %v816, %v812
    %v1053 = vpack.c.b16 %v817, %v813
    %v1054 = vpack.c.b16 %v822, %v818
    %v1055 = vpack.c.b16 %v823, %v819
    %v1056 = vpack.c.b16 %v824, %v820
    %v1057 = vpack.c.b16 %v825, %v821
    %v1058 = vpack.c.b16 %v830, %v826
    %v1059 = vpack.c.b16 %v831, %v827
    %v1060 = vpack.c.b16 %v832, %v828
    %v1061 = vpack.c.b16 %v833, %v829
    %v1062 = vpack.c.b16 %v838, %v834
    %v1063 = vpack.c.b16 %v839, %v835
    %v1064 = vpack.c.b16 %v840, %v836
    %v1065 = vpack.c.b16 %v841, %v837
    %v1066 = vpack.c.b16 %v846, %v842
    %v1067 = vpack.c.b16 %v847, %v843
    %v1068 = vpack.c.b16 %v848, %v844
    %v1069 = vpack.c.b16 %v849, %v845
    %v1070 = vpack.c.b16 %v854, %v850
    %v1071 = vpack.c.b16 %v855, %v851
    %v1072 = vpack.c.b16 %v856, %v852
    %v1073 = vpack.c.b16 %v857, %v853
    %v1074 = vpack.c.b16 %v862, %v858
    %v1075 = vpack.c.b16 %v863, %v859
    %v1076 = vpack.c.b16 %v864, %v860
    %v1077 = vpack.c.b16 %v865, %v861
    %v1078 = vpack.c.b16 %v870, %v866
    %v1079 = vpack.c.b16 %v871, %v867
    %v1080 = vpack.c.b16 %v872, %v868
    %v1081 = vpack.c.b16 %v873, %v869
    %v1082 = vpack.c.b16 %v878, %v874
    %v1083 = vpack.c.b16 %v879, %v875
    %v1084 = vpack.c.b16 %v880, %v876
    %v1085 = vpack.c.b16 %v881, %v877
    %v1086 = vpack.c.b16 %v886, %v882
    %v1087 = vpack.c.b16 %v887, %v883
    %v1088 = vpack.c.b16 %v888, %v884
    %v1089 = vpack.c.b16 %v889, %v885
    %v1090 = vpack.c.b16 %v894, %v890
    %v1091 = vpack.c.b16 %v895, %v891
    %v1092 = vpack.c.b16 %v896, %v892
    %v1093 = vpack.c.b16 %v897, %v893
    %v1094 = vpack.c.b16 %v902, %v898
    %v1095 = vpack.c.b16 %v903, %v899
    %v1096 = vpack.c.b16 %v904, %v900
    %v1097 = vpack.c.b16 %v905, %v901
    %1290 = vmatprep.subr.bf16.mxu0 %v907
    %1291 = vmatpush1.bf16.msra.mxu0 %v906
    %1292 = vmatprep.subr.bf16.mxu0 %v911
    %1293 = vmatpush1.bf16.msra.mxu0 %v910
    %1294 = vmatprep.subr.bf16.mxu0 %v915
    %1295 = vmatpush1.bf16.msra.mxu0 %v914
    %1296 = vmatprep.subr.bf16.mxu0 %v919
    %1297 = vmatpush1.bf16.msra.mxu0 %v918
    %1298 = vmatprep.subr.bf16.mxu0 %v923
    %1299 = vmatpush1.bf16.msra.mxu0 %v922
    %1300 = vmatprep.subr.bf16.mxu0 %v927
    %1301 = vmatpush1.bf16.msra.mxu0 %v926
    %1302 = vmatprep.subr.bf16.mxu0 %v931
    %1303 = vmatpush1.bf16.msra.mxu0 %v930
    %1304 = vmatprep.subr.bf16.mxu0 %v935
    %1305 = vmatpush1.bf16.msra.mxu0 %v934
    %1306 = vmatprep.subr.bf16.mxu0 %v939
    %1307 = vmatpush1.bf16.msra.mxu0 %v938
    %1308 = vmatprep.subr.bf16.mxu0 %v943
    %1309 = vmatpush1.bf16.msra.mxu0 %v942
    %1310 = vmatprep.subr.bf16.mxu0 %v947
    %1311 = vmatpush1.bf16.msra.mxu0 %v946
    %1312 = vmatprep.subr.bf16.mxu0 %v951
    %1313 = vmatpush1.bf16.msra.mxu0 %v950
    %1314 = vmatprep.subr.bf16.mxu0 %v955
    %1315 = vmatpush1.bf16.msra.mxu0 %v954
    %1316 = vmatprep.subr.bf16.mxu0 %v959
    %1317 = vmatpush1.bf16.msra.mxu0 %v958
    %1318 = vmatprep.subr.bf16.mxu0 %v963
    %1319 = vmatpush1.bf16.msra.mxu0 %v962
    %1320 = vmatprep.subr.bf16.mxu0 %v967
    %1321 = vmatpush1.bf16.msra.mxu0 %v966
    %1322 = vmatprep.mubr.bf16.mxu0 %v111
    %1323 = vmatmul.mubr.bf16.gmra.mrb[0].mxu0 %v110
    %v1324 = vpop.f32.mrb[0].mxu0
    %v1325 = vadd.f32 %v313, %v1324
    %v1326 = vpop.f32.mrb[0].mxu0
    %v1327 = vadd.f32 %v317, %v1326
    %v1328 = vpop.f32.mrb[0].mxu0
    %v1329 = vpop.f32.mrb[0].mxu0
    %1330 = vdwg.mxu0
    %1331 = vmatprep.subr.bf16.mxu0 %v971
    %1332 = vmatpush1.bf16.msra.mxu0 %v970
    %1333 = vmatprep.subr.bf16.mxu0 %v975
    %1334 = vmatpush1.bf16.msra.mxu0 %v974
    %1335 = vmatprep.subr.bf16.mxu0 %v979
    %1336 = vmatpush1.bf16.msra.mxu0 %v978
    %1337 = vmatprep.subr.bf16.mxu0 %v983
    %1338 = vmatpush1.bf16.msra.mxu0 %v982
    %1339 = vmatprep.subr.bf16.mxu0 %v987
    %1340 = vmatpush1.bf16.msra.mxu0 %v986
    %1341 = vmatprep.subr.bf16.mxu0 %v991
    %1342 = vmatpush1.bf16.msra.mxu0 %v990
    %1343 = vmatprep.subr.bf16.mxu0 %v995
    %1344 = vmatpush1.bf16.msra.mxu0 %v994
    %1345 = vmatprep.subr.bf16.mxu0 %v999
    %1346 = vmatpush1.bf16.msra.mxu0 %v998
    %1347 = vmatprep.subr.bf16.mxu0 %v1003
    %1348 = vmatpush1.bf16.msra.mxu0 %v1002
    %1349 = vmatprep.subr.bf16.mxu0 %v1007
    %1350 = vmatpush1.bf16.msra.mxu0 %v1006
    %1351 = vmatprep.subr.bf16.mxu0 %v1011
    %1352 = vmatpush1.bf16.msra.mxu0 %v1010
    %1353 = vmatprep.subr.bf16.mxu0 %v1015
    %1354 = vmatpush1.bf16.msra.mxu0 %v1014
    %1355 = vmatprep.subr.bf16.mxu0 %v1019
    %1356 = vmatpush1.bf16.msra.mxu0 %v1018
    %1357 = vmatprep.subr.bf16.mxu0 %v1023
    %1358 = vmatpush1.bf16.msra.mxu0 %v1022
    %1359 = vmatprep.subr.bf16.mxu0 %v1027
    %1360 = vmatpush1.bf16.msra.mxu0 %v1026
    %1361 = vmatprep.subr.bf16.mxu0 %v1031
    %1362 = vmatpush1.bf16.msra.mxu0 %v1030
    %1363 = vmatprep.mubr.bf16.mxu0 %v113
    %1364 = vmatmul.mubr.bf16.gmra.mrb[0].mxu0 %v112
    %v1365 = vpop.f32.mrb[0].mxu0
    %v1366 = vadd.f32 %v1325, %v1365
    %v1367 = vpop.f32.mrb[0].mxu0
    %v1368 = vadd.f32 %v1327, %v1367
    %v1369 = vpop.f32.mrb[0].mxu0
    %v1370 = vpop.f32.mrb[0].mxu0
    %1371 = vdwg.mxu0
    %1372 = vmatprep.subr.bf16.mxu0 %v1035
    %1373 = vmatpush1.bf16.msra.mxu0 %v1034
    %1374 = vmatprep.subr.bf16.mxu0 %v1039
    %1375 = vmatpush1.bf16.msra.mxu0 %v1038
    %1376 = vmatprep.subr.bf16.mxu0 %v1043
    %1377 = vmatpush1.bf16.msra.mxu0 %v1042
    %1378 = vmatprep.subr.bf16.mxu0 %v1047
    %1379 = vmatpush1.bf16.msra.mxu0 %v1046
    %1380 = vmatprep.subr.bf16.mxu0 %v1051
    %1381 = vmatpush1.bf16.msra.mxu0 %v1050
    %1382 = vmatprep.subr.bf16.mxu0 %v1055
    %1383 = vmatpush1.bf16.msra.mxu0 %v1054
    %1384 = vmatprep.subr.bf16.mxu0 %v1059
    %1385 = vmatpush1.bf16.msra.mxu0 %v1058
    %1386 = vmatprep.subr.bf16.mxu0 %v1063
    %1387 = vmatpush1.bf16.msra.mxu0 %v1062
    %1388 = vmatprep.subr.bf16.mxu0 %v1067
    %1389 = vmatpush1.bf16.msra.mxu0 %v1066
    %1390 = vmatprep.subr.bf16.mxu0 %v1071
    %1391 = vmatpush1.bf16.msra.mxu0 %v1070
    %1392 = vmatprep.subr.bf16.mxu0 %v1075
    %1393 = vmatpush1.bf16.msra.mxu0 %v1074
    %1394 = vmatprep.subr.bf16.mxu0 %v1079
    %1395 = vmatpush1.bf16.msra.mxu0 %v1078
    %1396 = vmatprep.subr.bf16.mxu0 %v1083
    %1397 = vmatpush1.bf16.msra.mxu0 %v1082
    %1398 = vmatprep.subr.bf16.mxu0 %v1087
    %1399 = vmatpush1.bf16.msra.mxu0 %v1086
    %1400 = vmatprep.subr.bf16.mxu0 %v1091
    %1401 = vmatpush1.bf16.msra.mxu0 %v1090
    %1402 = vmatprep.subr.bf16.mxu0 %v1095
    %1403 = vmatpush1.bf16.msra.mxu0 %v1094
    %1404 = vmatprep.mubr.bf16.mxu0 %v115
    %1405 = vmatmul.mubr.bf16.gmra.mrb[0].mxu0 %v114
    %v1406 = vpop.f32.mrb[0].mxu0
    %v1407 = vadd.f32 %v1366, %v1406
    %v1408 = vpop.f32.mrb[0].mxu0
    %v1409 = vadd.f32 %v1368, %v1408
    %v1410 = vpop.f32.mrb[0].mxu0
    %v1411 = vpop.f32.mrb[0].mxu0
    %1412 = vdwg.mxu0
    %1413 = vmatprep.subr.bf16.mxu0 %v909
    %1414 = vmatpush1.bf16.msra.mxu0 %v908
    %1415 = vmatprep.subr.bf16.mxu0 %v913
    %1416 = vmatpush1.bf16.msra.mxu0 %v912
    %1417 = vmatprep.subr.bf16.mxu0 %v917
    %1418 = vmatpush1.bf16.msra.mxu0 %v916
    %1419 = vmatprep.subr.bf16.mxu0 %v921
    %1420 = vmatpush1.bf16.msra.mxu0 %v920
    %1421 = vmatprep.subr.bf16.mxu0 %v925
    %1422 = vmatpush1.bf16.msra.mxu0 %v924
    %1423 = vmatprep.subr.bf16.mxu0 %v929
    %1424 = vmatpush1.bf16.msra.mxu0 %v928
    %1425 = vmatprep.subr.bf16.mxu0 %v933
    %1426 = vmatpush1.bf16.msra.mxu0 %v932
    %1427 = vmatprep.subr.bf16.mxu0 %v937
    %1428 = vmatpush1.bf16.msra.mxu0 %v936
    %1429 = vmatprep.subr.bf16.mxu0 %v941
    %1430 = vmatpush1.bf16.msra.mxu0 %v940
    %1431 = vmatprep.subr.bf16.mxu0 %v945
    %1432 = vmatpush1.bf16.msra.mxu0 %v944
    %1433 = vmatprep.subr.bf16.mxu0 %v949
    %1434 = vmatpush1.bf16.msra.mxu0 %v948
    %1435 = vmatprep.subr.bf16.mxu0 %v953
    %1436 = vmatpush1.bf16.msra.mxu0 %v952
    %1437 = vmatprep.subr.bf16.mxu0 %v957
    %1438 = vmatpush1.bf16.msra.mxu0 %v956
    %1439 = vmatprep.subr.bf16.mxu0 %v961
    %1440 = vmatpush1.bf16.msra.mxu0 %v960
    %1441 = vmatprep.subr.bf16.mxu0 %v965
    %1442 = vmatpush1.bf16.msra.mxu0 %v964
    %1443 = vmatprep.subr.bf16.mxu0 %v969
    %1444 = vmatpush1.bf16.msra.mxu0 %v968
    %1445 = vmatprep.mubr.bf16.mxu0 %v111
    %1446 = vmatmul.mubr.bf16.gmra.mrb[0].mxu0 %v110
    %v1447 = vpop.f32.mrb[0].mxu0
    %v1448 = vadd.f32 %v321, %v1447
    %v1449 = vpop.f32.mrb[0].mxu0
    %v1450 = vadd.f32 %v325, %v1449
    %v1451 = vpop.f32.mrb[0].mxu0
    %v1452 = vpop.f32.mrb[0].mxu0
    %1453 = vdwg.mxu0
    %1454 = vmatprep.subr.bf16.mxu0 %v973
    %1455 = vmatpush1.bf16.msra.mxu0 %v972
    %1456 = vmatprep.subr.bf16.mxu0 %v977
    %1457 = vmatpush1.bf16.msra.mxu0 %v976
    %1458 = vmatprep.subr.bf16.mxu0 %v981
    %1459 = vmatpush1.bf16.msra.mxu0 %v980
    %1460 = vmatprep.subr.bf16.mxu0 %v985
    %1461 = vmatpush1.bf16.msra.mxu0 %v984
    %1462 = vmatprep.subr.bf16.mxu0 %v989
    %1463 = vmatpush1.bf16.msra.mxu0 %v988
    %1464 = vmatprep.subr.bf16.mxu0 %v993
    %1465 = vmatpush1.bf16.msra.mxu0 %v992
    %1466 = vmatprep.subr.bf16.mxu0 %v997
    %1467 = vmatpush1.bf16.msra.mxu0 %v996
    %1468 = vmatprep.subr.bf16.mxu0 %v1001
    %1469 = vmatpush1.bf16.msra.mxu0 %v1000
    %1470 = vmatprep.subr.bf16.mxu0 %v1005
    %1471 = vmatpush1.bf16.msra.mxu0 %v1004
    %1472 = vmatprep.subr.bf16.mxu0 %v1009
    %1473 = vmatpush1.bf16.msra.mxu0 %v1008
    %1474 = vmatprep.subr.bf16.mxu0 %v1013
    %1475 = vmatpush1.bf16.msra.mxu0 %v1012
    %1476 = vmatprep.subr.bf16.mxu0 %v1017
    %1477 = vmatpush1.bf16.msra.mxu0 %v1016
    %1478 = vmatprep.subr.bf16.mxu0 %v1021
    %1479 = vmatpush1.bf16.msra.mxu0 %v1020
    %1480 = vmatprep.subr.bf16.mxu0 %v1025
    %1481 = vmatpush1.bf16.msra.mxu0 %v1024
    %1482 = vmatprep.subr.bf16.mxu0 %v1029
    %1483 = vmatpush1.bf16.msra.mxu0 %v1028
    %1484 = vmatprep.subr.bf16.mxu0 %v1033
    %1485 = vmatpush1.bf16.msra.mxu0 %v1032
    %1486 = vmatprep.mubr.bf16.mxu0 %v113
    %1487 = vmatmul.mubr.bf16.gmra.mrb[0].mxu0 %v112
    %v1488 = vpop.f32.mrb[0].mxu0
    %v1489 = vadd.f32 %v1448, %v1488
    %v1490 = vpop.f32.mrb[0].mxu0
    %v1491 = vadd.f32 %v1450, %v1490
    %v1492 = vpop.f32.mrb[0].mxu0
    %v1493 = vpop.f32.mrb[0].mxu0
    %1494 = vdwg.mxu0
    %1495 = vmatprep.subr.bf16.mxu0 %v1037
    %1496 = vmatpush1.bf16.msra.mxu0 %v1036
    %1497 = vmatprep.subr.bf16.mxu0 %v1041
    %1498 = vmatpush1.bf16.msra.mxu0 %v1040
    %1499 = vmatprep.subr.bf16.mxu0 %v1045
    %1500 = vmatpush1.bf16.msra.mxu0 %v1044
    %1501 = vmatprep.subr.bf16.mxu0 %v1049
    %1502 = vmatpush1.bf16.msra.mxu0 %v1048
    %1503 = vmatprep.subr.bf16.mxu0 %v1053
    %1504 = vmatpush1.bf16.msra.mxu0 %v1052
    %1505 = vmatprep.subr.bf16.mxu0 %v1057
    %1506 = vmatpush1.bf16.msra.mxu0 %v1056
    %1507 = vmatprep.subr.bf16.mxu0 %v1061
    %1508 = vmatpush1.bf16.msra.mxu0 %v1060
    %1509 = vmatprep.subr.bf16.mxu0 %v1065
    %1510 = vmatpush1.bf16.msra.mxu0 %v1064
    %1511 = vmatprep.subr.bf16.mxu0 %v1069
    %1512 = vmatpush1.bf16.msra.mxu0 %v1068
    %1513 = vmatprep.subr.bf16.mxu0 %v1073
    %1514 = vmatpush1.bf16.msra.mxu0 %v1072
    %1515 = vmatprep.subr.bf16.mxu0 %v1077
    %1516 = vmatpush1.bf16.msra.mxu0 %v1076
    %1517 = vmatprep.subr.bf16.mxu0 %v1081
    %1518 = vmatpush1.bf16.msra.mxu0 %v1080
    %1519 = vmatprep.subr.bf16.mxu0 %v1085
    %1520 = vmatpush1.bf16.msra.mxu0 %v1084
    %1521 = vmatprep.subr.bf16.mxu0 %v1089
    %1522 = vmatpush1.bf16.msra.mxu0 %v1088
    %1523 = vmatprep.subr.bf16.mxu0 %v1093
    %1524 = vmatpush1.bf16.msra.mxu0 %v1092
    %1525 = vmatprep.subr.bf16.mxu0 %v1097
    %1526 = vmatpush1.bf16.msra.mxu0 %v1096
    %1527 = vmatprep.mubr.bf16.mxu0 %v115
    %1528 = vmatmul.mubr.bf16.gmra.mrb[0].mxu0 %v114
    %v1529 = vpop.f32.mrb[0].mxu0
    %v1530 = vadd.f32 %v1489, %v1529
    %v1531 = vpop.f32.mrb[0].mxu0
    %v1532 = vadd.f32 %v1491, %v1531
    %v1533 = vpop.f32.mrb[0].mxu0
    %v1534 = vpop.f32.mrb[0].mxu0
    %1535 = vdwg.mxu0
    %vm1536 = vcmp.ge.f32.partialorder %v1407, 0.0
    %vm1537 = vcmp.ge.f32.partialorder %v1409, 0.0
    %vm1538 = vcmp.ge.f32.partialorder %v1530, 0.0
    %vm1539 = vcmp.ge.f32.partialorder %v1532, 0.0
    %v1540 = vmul.f32 %v1407, 0.2
    %v1541 = vmul.f32 %v1409, 0.2
    %v1542 = vmul.f32 %v1530, 0.2
    %v1543 = vmul.f32 %v1532, 0.2
    %v1544 = vsel %vm1536, %v1407, %v1540
    %v1545 = vsel %vm1537, %v1409, %v1541
    %v1546 = vsel %vm1538, %v1530, %v1542
    %v1547 = vsel %vm1539, %v1532, %v1543
    %v1548 = vpack.c.bf16 %v1544, %v1544
    %v1549 = vpack.c.bf16 %v1545, %v1545
    %v1550 = vpack.c.bf16 %v1546, %v1546
    %v1551 = vpack.c.bf16 %v1547, %v1547
    %v1552 = vld [vmem:[#allocation5] sm:$0xff]
    %v1553 = vld [vmem:[#allocation5 + $0x8] sm:$0xff]
    %v1554 = vld [vmem:[#allocation5 + $0x10] sm:$0xff]
    %v1555 = vld [vmem:[#allocation5 + $0x18] sm:$0xff]
    %v1556 = vld [vmem:[#allocation5 + $0x20] sm:$0xff]
    %v1557 = vld [vmem:[#allocation5 + $0x28] sm:$0xff]
    %v1558 = vld [vmem:[#allocation5 + $0x30] sm:$0xff]
    %v1559 = vld [vmem:[#allocation5 + $0x38] sm:$0xff]
    %v1560 = vld [vmem:[#allocation5 + $0x40] sm:$0xff]
    %v1561 = vld [vmem:[#allocation5 + $0x48] sm:$0xff]
    %v1562 = vld [vmem:[#allocation5 + $0x50] sm:$0xff]
    %v1563 = vld [vmem:[#allocation5 + $0x58] sm:$0xff]
    %v1564 = vld [vmem:[#allocation5 + $0x60] sm:$0xff]
    %v1565 = vld [vmem:[#allocation5 + $0x68] sm:$0xff]
    %v1566 = vld [vmem:[#allocation5 + $0x70] sm:$0xff]
    %v1567 = vld [vmem:[#allocation5 + $0x78] sm:$0xff]
    %v1568 = vld [vmem:[#allocation5 + $0x80] sm:$0xff]
    %v1569 = vld [vmem:[#allocation5 + $0x88] sm:$0xff]
    %v1570 = vld [vmem:[#allocation5 + $0x90] sm:$0xff]
    %v1571 = vld [vmem:[#allocation5 + $0x98] sm:$0xff]
    %v1572 = vld [vmem:[#allocation5 + $0xa0] sm:$0xff]
    %v1573 = vld [vmem:[#allocation5 + $0xa8] sm:$0xff]
    %v1574 = vld [vmem:[#allocation5 + $0xb0] sm:$0xff]
    %v1575 = vld [vmem:[#allocation5 + $0xb8] sm:$0xff]
    %v1576 = vld [vmem:[#allocation5 + $0xc0] sm:$0xff]
    %v1577 = vld [vmem:[#allocation5 + $0xc8] sm:$0xff]
    %v1578 = vld [vmem:[#allocation5 + $0xd0] sm:$0xff]
    %v1579 = vld [vmem:[#allocation5 + $0xd8] sm:$0xff]
    %v1580 = vld [vmem:[#allocation5 + $0xe0] sm:$0xff]
    %v1581 = vld [vmem:[#allocation5 + $0xe8] sm:$0xff]
    %v1582 = vld [vmem:[#allocation5 + $0xf0] sm:$0xff]
    %v1583 = vld [vmem:[#allocation5 + $0xf8] sm:$0xff]
    %v1584 = vld [vmem:[#allocation5 + $0x100] sm:$0xff]
    %v1585 = vld [vmem:[#allocation5 + $0x108] sm:$0xff]
    %v1586 = vld [vmem:[#allocation5 + $0x110] sm:$0xff]
    %v1587 = vld [vmem:[#allocation5 + $0x118] sm:$0xff]
    %v1588 = vld [vmem:[#allocation5 + $0x120] sm:$0xff]
    %v1589 = vld [vmem:[#allocation5 + $0x128] sm:$0xff]
    %v1590 = vld [vmem:[#allocation5 + $0x130] sm:$0xff]
    %v1591 = vld [vmem:[#allocation5 + $0x138] sm:$0xff]
    %v1592 = vld [vmem:[#allocation5 + $0x140] sm:$0xff]
    %v1593 = vld [vmem:[#allocation5 + $0x148] sm:$0xff]
    %v1594 = vld [vmem:[#allocation5 + $0x150] sm:$0xff]
    %v1595 = vld [vmem:[#allocation5 + $0x158] sm:$0xff]
    %v1596 = vld [vmem:[#allocation5 + $0x160] sm:$0xff]
    %v1597 = vld [vmem:[#allocation5 + $0x168] sm:$0xff]
    %v1598 = vld [vmem:[#allocation5 + $0x170] sm:$0xff]
    %v1599 = vld [vmem:[#allocation5 + $0x178] sm:$0xff]
    %v1600 = vld [vmem:[#allocation5 + $0x180] sm:$0xff]
    %v1601 = vld [vmem:[#allocation5 + $0x188] sm:$0xff]
    %v1602 = vld [vmem:[#allocation5 + $0x190] sm:$0xff]
    %v1603 = vld [vmem:[#allocation5 + $0x198] sm:$0xff]
    %v1604 = vld [vmem:[#allocation5 + $0x1a0] sm:$0xff]
    %v1605 = vld [vmem:[#allocation5 + $0x1a8] sm:$0xff]
    %v1606 = vld [vmem:[#allocation5 + $0x1b0] sm:$0xff]
    %v1607 = vld [vmem:[#allocation5 + $0x1b8] sm:$0xff]
    %v1608 = vld [vmem:[#allocation5 + $0x1c0] sm:$0xff]
    %v1609 = vld [vmem:[#allocation5 + $0x1c8] sm:$0xff]
    %v1610 = vld [vmem:[#allocation5 + $0x1d0] sm:$0xff]
    %v1611 = vld [vmem:[#allocation5 + $0x1d8] sm:$0xff]
    %v1612 = vld [vmem:[#allocation5 + $0x1e0] sm:$0xff]
    %v1613 = vld [vmem:[#allocation5 + $0x1e8] sm:$0xff]
    %v1614 = vld [vmem:[#allocation5 + $0x1f0] sm:$0xff]
    %v1615 = vld [vmem:[#allocation5 + $0x1f8] sm:$0xff]
    %v1616 = vld [vmem:[%s4] sm:$0x3]
    %v1618 = vlaneseq
    %v1619 = vshrl.u32 %v1618, 7
    %v1620 = vsub.s32 0, %v1619
    %v1621 = vrot.slane %v1616, %v1620
    %v1622 = vlaneseq
    %v1623 = vshrl.u32 %v1622, 7
    %v1624 = vsub.s32 1, %v1623
    %v1625 = vrot.slane %v1616, %v1624
    %v1692 = vunpack.c.l.b16 %v1552
    %v1693 = vunpack.c.h.b16 %v1552
    %v1694 = vunpack.c.l.b16 %v1553
    %v1695 = vunpack.c.h.b16 %v1553
    %v1696 = vunpack.c.l.b16 %v1554
    %v1697 = vunpack.c.h.b16 %v1554
    %v1698 = vunpack.c.l.b16 %v1555
    %v1699 = vunpack.c.h.b16 %v1555
    %v1700 = vunpack.c.l.b16 %v1556
    %v1701 = vunpack.c.h.b16 %v1556
    %v1702 = vunpack.c.l.b16 %v1557
    %v1703 = vunpack.c.h.b16 %v1557
    %v1704 = vunpack.c.l.b16 %v1558
    %v1705 = vunpack.c.h.b16 %v1558
    %v1706 = vunpack.c.l.b16 %v1559
    %v1707 = vunpack.c.h.b16 %v1559
    %v1708 = vunpack.c.l.b16 %v1560
    %v1709 = vunpack.c.h.b16 %v1560
    %v1710 = vunpack.c.l.b16 %v1561
    %v1711 = vunpack.c.h.b16 %v1561
    %v1712 = vunpack.c.l.b16 %v1562
    %v1713 = vunpack.c.h.b16 %v1562
    %v1714 = vunpack.c.l.b16 %v1563
    %v1715 = vunpack.c.h.b16 %v1563
    %v1716 = vunpack.c.l.b16 %v1564
    %v1717 = vunpack.c.h.b16 %v1564
    %v1718 = vunpack.c.l.b16 %v1565
    %v1719 = vunpack.c.h.b16 %v1565
    %v1720 = vunpack.c.l.b16 %v1566
    %v1721 = vunpack.c.h.b16 %v1566
    %v1722 = vunpack.c.l.b16 %v1567
    %v1723 = vunpack.c.h.b16 %v1567
    %v1724 = vunpack.c.l.b16 %v1568
    %v1725 = vunpack.c.h.b16 %v1568
    %v1726 = vunpack.c.l.b16 %v1569
    %v1727 = vunpack.c.h.b16 %v1569
    %v1728 = vunpack.c.l.b16 %v1570
    %v1729 = vunpack.c.h.b16 %v1570
    %v1730 = vunpack.c.l.b16 %v1571
    %v1731 = vunpack.c.h.b16 %v1571
    %v1732 = vunpack.c.l.b16 %v1572
    %v1733 = vunpack.c.h.b16 %v1572
    %v1734 = vunpack.c.l.b16 %v1573
    %v1735 = vunpack.c.h.b16 %v1573
    %v1736 = vunpack.c.l.b16 %v1574
    %v1737 = vunpack.c.h.b16 %v1574
    %v1738 = vunpack.c.l.b16 %v1575
    %v1739 = vunpack.c.h.b16 %v1575
    %v1740 = vunpack.c.l.b16 %v1576
    %v1741 = vunpack.c.h.b16 %v1576
    %v1742 = vunpack.c.l.b16 %v1577
    %v1743 = vunpack.c.h.b16 %v1577
    %v1744 = vunpack.c.l.b16 %v1578
    %v1745 = vunpack.c.h.b16 %v1578
    %v1746 = vunpack.c.l.b16 %v1579
    %v1747 = vunpack.c.h.b16 %v1579
    %v1748 = vunpack.c.l.b16 %v1580
    %v1749 = vunpack.c.h.b16 %v1580
    %v1750 = vunpack.c.l.b16 %v1581
    %v1751 = vunpack.c.h.b16 %v1581
    %v1752 = vunpack.c.l.b16 %v1582
    %v1753 = vunpack.c.h.b16 %v1582
    %v1754 = vunpack.c.l.b16 %v1583
    %v1755 = vunpack.c.h.b16 %v1583
    %v1756 = vunpack.c.l.b16 %v1584
    %v1757 = vunpack.c.h.b16 %v1584
    %v1758 = vunpack.c.l.b16 %v1585
    %v1759 = vunpack.c.h.b16 %v1585
    %v1760 = vunpack.c.l.b16 %v1586
    %v1761 = vunpack.c.h.b16 %v1586
    %v1762 = vunpack.c.l.b16 %v1587
    %v1763 = vunpack.c.h.b16 %v1587
    %v1764 = vunpack.c.l.b16 %v1588
    %v1765 = vunpack.c.h.b16 %v1588
    %v1766 = vunpack.c.l.b16 %v1589
    %v1767 = vunpack.c.h.b16 %v1589
    %v1768 = vunpack.c.l.b16 %v1590
    %v1769 = vunpack.c.h.b16 %v1590
    %v1770 = vunpack.c.l.b16 %v1591
    %v1771 = vunpack.c.h.b16 %v1591
    %v1772 = vunpack.c.l.b16 %v1592
    %v1773 = vunpack.c.h.b16 %v1592
    %v1774 = vunpack.c.l.b16 %v1593
    %v1775 = vunpack.c.h.b16 %v1593
    %v1776 = vunpack.c.l.b16 %v1594
    %v1777 = vunpack.c.h.b16 %v1594
    %v1778 = vunpack.c.l.b16 %v1595
    %v1779 = vunpack.c.h.b16 %v1595
    %v1780 = vunpack.c.l.b16 %v1596
    %v1781 = vunpack.c.h.b16 %v1596
    %v1782 = vunpack.c.l.b16 %v1597
    %v1783 = vunpack.c.h.b16 %v1597
    %v1784 = vunpack.c.l.b16 %v1598
    %v1785 = vunpack.c.h.b16 %v1598
    %v1786 = vunpack.c.l.b16 %v1599
    %v1787 = vunpack.c.h.b16 %v1599
    %v1788 = vunpack.c.l.b16 %v1600
    %v1789 = vunpack.c.h.b16 %v1600
    %v1790 = vunpack.c.l.b16 %v1601
    %v1791 = vunpack.c.h.b16 %v1601
    %v1792 = vunpack.c.l.b16 %v1602
    %v1793 = vunpack.c.h.b16 %v1602
    %v1794 = vunpack.c.l.b16 %v1603
    %v1795 = vunpack.c.h.b16 %v1603
    %v1796 = vunpack.c.l.b16 %v1604
    %v1797 = vunpack.c.h.b16 %v1604
    %v1798 = vunpack.c.l.b16 %v1605
    %v1799 = vunpack.c.h.b16 %v1605
    %v1800 = vunpack.c.l.b16 %v1606
    %v1801 = vunpack.c.h.b16 %v1606
    %v1802 = vunpack.c.l.b16 %v1607
    %v1803 = vunpack.c.h.b16 %v1607
    %v1804 = vunpack.c.l.b16 %v1608
    %v1805 = vunpack.c.h.b16 %v1608
    %v1806 = vunpack.c.l.b16 %v1609
    %v1807 = vunpack.c.h.b16 %v1609
    %v1808 = vunpack.c.l.b16 %v1610
    %v1809 = vunpack.c.h.b16 %v1610
    %v1810 = vunpack.c.l.b16 %v1611
    %v1811 = vunpack.c.h.b16 %v1611
    %v1812 = vunpack.c.l.b16 %v1612
    %v1813 = vunpack.c.h.b16 %v1612
    %v1814 = vunpack.c.l.b16 %v1613
    %v1815 = vunpack.c.h.b16 %v1613
    %v1816 = vunpack.c.l.b16 %v1614
    %v1817 = vunpack.c.h.b16 %v1614
    %v1818 = vunpack.c.l.b16 %v1615
    %v1819 = vunpack.c.h.b16 %v1615
    %v1820 = vpack.c.b16 %v1694, %v1692
    %v1821 = vpack.c.b16 %v1695, %v1693
    %v1822 = vpack.c.b16 %v1698, %v1696
    %v1823 = vpack.c.b16 %v1699, %v1697
    %v1824 = vpack.c.b16 %v1702, %v1700
    %v1825 = vpack.c.b16 %v1703, %v1701
    %v1826 = vpack.c.b16 %v1706, %v1704
    %v1827 = vpack.c.b16 %v1707, %v1705
    %v1828 = vpack.c.b16 %v1710, %v1708
    %v1829 = vpack.c.b16 %v1711, %v1709
    %v1830 = vpack.c.b16 %v1714, %v1712
    %v1831 = vpack.c.b16 %v1715, %v1713
    %v1832 = vpack.c.b16 %v1718, %v1716
    %v1833 = vpack.c.b16 %v1719, %v1717
    %v1834 = vpack.c.b16 %v1722, %v1720
    %v1835 = vpack.c.b16 %v1723, %v1721
    %v1836 = vpack.c.b16 %v1726, %v1724
    %v1837 = vpack.c.b16 %v1727, %v1725
    %v1838 = vpack.c.b16 %v1730, %v1728
    %v1839 = vpack.c.b16 %v1731, %v1729
    %v1840 = vpack.c.b16 %v1734, %v1732
    %v1841 = vpack.c.b16 %v1735, %v1733
    %v1842 = vpack.c.b16 %v1738, %v1736
    %v1843 = vpack.c.b16 %v1739, %v1737
    %v1844 = vpack.c.b16 %v1742, %v1740
    %v1845 = vpack.c.b16 %v1743, %v1741
    %v1846 = vpack.c.b16 %v1746, %v1744
    %v1847 = vpack.c.b16 %v1747, %v1745
    %v1848 = vpack.c.b16 %v1750, %v1748
    %v1849 = vpack.c.b16 %v1751, %v1749
    %v1850 = vpack.c.b16 %v1754, %v1752
    %v1851 = vpack.c.b16 %v1755, %v1753
    %v1852 = vpack.c.b16 %v1758, %v1756
    %v1853 = vpack.c.b16 %v1759, %v1757
    %v1854 = vpack.c.b16 %v1762, %v1760
    %v1855 = vpack.c.b16 %v1763, %v1761
    %v1856 = vpack.c.b16 %v1766, %v1764
    %v1857 = vpack.c.b16 %v1767, %v1765
    %v1858 = vpack.c.b16 %v1770, %v1768
    %v1859 = vpack.c.b16 %v1771, %v1769
    %v1860 = vpack.c.b16 %v1774, %v1772
    %v1861 = vpack.c.b16 %v1775, %v1773
    %v1862 = vpack.c.b16 %v1778, %v1776
    %v1863 = vpack.c.b16 %v1779, %v1777
    %v1864 = vpack.c.b16 %v1782, %v1780
    %v1865 = vpack.c.b16 %v1783, %v1781
    %v1866 = vpack.c.b16 %v1786, %v1784
    %v1867 = vpack.c.b16 %v1787, %v1785
    %v1868 = vpack.c.b16 %v1790, %v1788
    %v1869 = vpack.c.b16 %v1791, %v1789
    %v1870 = vpack.c.b16 %v1794, %v1792
    %v1871 = vpack.c.b16 %v1795, %v1793
    %v1872 = vpack.c.b16 %v1798, %v1796
    %v1873 = vpack.c.b16 %v1799, %v1797
    %v1874 = vpack.c.b16 %v1802, %v1800
    %v1875 = vpack.c.b16 %v1803, %v1801
    %v1876 = vpack.c.b16 %v1806, %v1804
    %v1877 = vpack.c.b16 %v1807, %v1805
    %v1878 = vpack.c.b16 %v1810, %v1808
    %v1879 = vpack.c.b16 %v1811, %v1809
    %v1880 = vpack.c.b16 %v1814, %v1812
    %v1881 = vpack.c.b16 %v1815, %v1813
    %v1882 = vpack.c.b16 %v1818, %v1816
    %v1883 = vpack.c.b16 %v1819, %v1817
    %1948 = vmatprep.subr.bf16.mxu0 %v1821
    %1949 = vmatpush1.bf16.msra.mxu0 %v1820
    %1950 = vmatprep.subr.bf16.mxu0 %v1823
    %1951 = vmatpush1.bf16.msra.mxu0 %v1822
    %1952 = vmatprep.subr.bf16.mxu0 %v1825
    %1953 = vmatpush1.bf16.msra.mxu0 %v1824
    %1954 = vmatprep.subr.bf16.mxu0 %v1827
    %1955 = vmatpush1.bf16.msra.mxu0 %v1826
    %1956 = vmatprep.subr.bf16.mxu0 %v1829
    %1957 = vmatpush1.bf16.msra.mxu0 %v1828
    %1958 = vmatprep.subr.bf16.mxu0 %v1831
    %1959 = vmatpush1.bf16.msra.mxu0 %v1830
    %1960 = vmatprep.subr.bf16.mxu0 %v1833
    %1961 = vmatpush1.bf16.msra.mxu0 %v1832
    %1962 = vmatprep.subr.bf16.mxu0 %v1835
    %1963 = vmatpush1.bf16.msra.mxu0 %v1834
    %1964 = vmatprep.subr.bf16.mxu0 %v1837
    %1965 = vmatpush1.bf16.msra.mxu0 %v1836
    %1966 = vmatprep.subr.bf16.mxu0 %v1839
    %1967 = vmatpush1.bf16.msra.mxu0 %v1838
    %1968 = vmatprep.subr.bf16.mxu0 %v1841
    %1969 = vmatpush1.bf16.msra.mxu0 %v1840
    %1970 = vmatprep.subr.bf16.mxu0 %v1843
    %1971 = vmatpush1.bf16.msra.mxu0 %v1842
    %1972 = vmatprep.subr.bf16.mxu0 %v1845
    %1973 = vmatpush1.bf16.msra.mxu0 %v1844
    %1974 = vmatprep.subr.bf16.mxu0 %v1847
    %1975 = vmatpush1.bf16.msra.mxu0 %v1846
    %1976 = vmatprep.subr.bf16.mxu0 %v1849
    %1977 = vmatpush1.bf16.msra.mxu0 %v1848
    %1978 = vmatprep.subr.bf16.mxu0 %v1851
    %1979 = vmatpush1.bf16.msra.mxu0 %v1850
    %1980 = vmatprep.mubr.bf16.mxu0 %v1549
    %1981 = vmatmul.mubr.bf16.gmra.mrb[0].mxu0 %v1548
    %v1982 = vpop.f32.mrb[0].mxu0
    %v1983 = vadd.f32 %v1621, %v1982
    %v1984 = vpop.f32.mrb[0].mxu0
    %v1985 = vadd.f32 %v1625, %v1984
    %v1986 = vpop.f32.mrb[0].mxu0
    %v1987 = vpop.f32.mrb[0].mxu0
    %1988 = vdwg.mxu0
    %1989 = vmatprep.subr.bf16.mxu0 %v1853
    %1990 = vmatpush1.bf16.msra.mxu0 %v1852
    %1991 = vmatprep.subr.bf16.mxu0 %v1855
    %1992 = vmatpush1.bf16.msra.mxu0 %v1854
    %1993 = vmatprep.subr.bf16.mxu0 %v1857
    %1994 = vmatpush1.bf16.msra.mxu0 %v1856
    %1995 = vmatprep.subr.bf16.mxu0 %v1859
    %1996 = vmatpush1.bf16.msra.mxu0 %v1858
    %1997 = vmatprep.subr.bf16.mxu0 %v1861
    %1998 = vmatpush1.bf16.msra.mxu0 %v1860
    %1999 = vmatprep.subr.bf16.mxu0 %v1863
    %2000 = vmatpush1.bf16.msra.mxu0 %v1862
    %2001 = vmatprep.subr.bf16.mxu0 %v1865
    %2002 = vmatpush1.bf16.msra.mxu0 %v1864
    %2003 = vmatprep.subr.bf16.mxu0 %v1867
    %2004 = vmatpush1.bf16.msra.mxu0 %v1866
    %2005 = vmatprep.subr.bf16.mxu0 %v1869
    %2006 = vmatpush1.bf16.msra.mxu0 %v1868
    %2007 = vmatprep.subr.bf16.mxu0 %v1871
    %2008 = vmatpush1.bf16.msra.mxu0 %v1870
    %2009 = vmatprep.subr.bf16.mxu0 %v1873
    %2010 = vmatpush1.bf16.msra.mxu0 %v1872
    %2011 = vmatprep.subr.bf16.mxu0 %v1875
    %2012 = vmatpush1.bf16.msra.mxu0 %v1874
    %2013 = vmatprep.subr.bf16.mxu0 %v1877
    %2014 = vmatpush1.bf16.msra.mxu0 %v1876
    %2015 = vmatprep.subr.bf16.mxu0 %v1879
    %2016 = vmatpush1.bf16.msra.mxu0 %v1878
    %2017 = vmatprep.subr.bf16.mxu0 %v1881
    %2018 = vmatpush1.bf16.msra.mxu0 %v1880
    %2019 = vmatprep.subr.bf16.mxu0 %v1883
    %2020 = vmatpush1.bf16.msra.mxu0 %v1882
    %2021 = vmatprep.mubr.bf16.mxu0 %v1551
    %2022 = vmatmul.mubr.bf16.gmra.mrb[0].mxu0 %v1550
    %v2023 = vpop.f32.mrb[0].mxu0
    %v2024 = vadd.f32 %v1983, %v2023
    %v2025 = vpop.f32.mrb[0].mxu0
    %v2026 = vadd.f32 %v1985, %v2025
    %v2027 = vpop.f32.mrb[0].mxu0
    %v2028 = vpop.f32.mrb[0].mxu0
    %2029 = vdwg.mxu0
    %vm2030 = vcmp.ge.f32.partialorder %v2024, 0.0
    %vm2031 = vcmp.ge.f32.partialorder %v2026, 0.0
    %v2032 = vmul.f32 %v2024, 0.2
    %v2033 = vmul.f32 %v2026, 0.2
    %v2034 = vsel %vm2030, %v2024, %v2032
    %v2035 = vsel %vm2031, %v2026, %v2033
    %v2036 = vpack.c.bf16 %v2034, %v2034
    %v2037 = vpack.c.bf16 %v2035, %v2035
    %v2038 = vld [vmem:[%s5] sm:$0xf]
    %v2039 = vld [vmem:[%s5 + $0x4] sm:$0xf]
    %v2040 = vld [vmem:[%s5 + $0x8] sm:$0xf]
    %v2041 = vld [vmem:[%s5 + $0xc] sm:$0xf]
    %v2042 = vld [vmem:[%s5 + $0x10] sm:$0xf]
    %v2043 = vld [vmem:[%s5 + $0x14] sm:$0xf]
    %v2044 = vld [vmem:[%s5 + $0x18] sm:$0xf]
    %v2045 = vld [vmem:[%s5 + $0x1c] sm:$0xf]
    %v2046 = vld [vmem:[%s5 + $0x20] sm:$0xf]
    %v2047 = vld [vmem:[%s5 + $0x24] sm:$0xf]
    %v2048 = vld [vmem:[%s5 + $0x28] sm:$0xf]
    %v2049 = vld [vmem:[%s5 + $0x2c] sm:$0xf]
    %v2050 = vld [vmem:[%s5 + $0x30] sm:$0xf]
    %v2051 = vld [vmem:[%s5 + $0x34] sm:$0xf]
    %v2052 = vld [vmem:[%s5 + $0x38] sm:$0xf]
    %v2053 = vld [vmem:[%s5 + $0x3c] sm:$0xf]
    %v2054 = vld [vmem:[%s5 + $0x40] sm:$0xf]
    %v2055 = vld [vmem:[%s5 + $0x44] sm:$0xf]
    %v2056 = vld [vmem:[%s5 + $0x48] sm:$0xf]
    %v2057 = vld [vmem:[%s5 + $0x4c] sm:$0xf]
    %v2058 = vld [vmem:[%s5 + $0x50] sm:$0xf]
    %v2059 = vld [vmem:[%s5 + $0x54] sm:$0xf]
    %v2060 = vld [vmem:[%s5 + $0x58] sm:$0xf]
    %v2061 = vld [vmem:[%s5 + $0x5c] sm:$0xf]
    %v2062 = vld [vmem:[%s5 + $0x60] sm:$0xf]
    %v2063 = vld [vmem:[%s5 + $0x64] sm:$0xf]
    %v2064 = vld [vmem:[%s5 + $0x68] sm:$0xf]
    %v2065 = vld [vmem:[%s5 + $0x6c] sm:$0xf]
    %v2066 = vld [vmem:[%s5 + $0x70] sm:$0xf]
    %v2067 = vld [vmem:[%s5 + $0x74] sm:$0xf]
    %v2068 = vld [vmem:[%s5 + $0x78] sm:$0xf]
    %v2069 = vld [vmem:[%s5 + $0x7c] sm:$0xf]
    %v2070 = vld [vmem:[%s6] sm:$0x1]
    %v2072 = vlaneseq
    %v2073 = vshrl.u32 %v2072, 7
    %v2074 = vsub.s32 0, %v2073
    %v2075 = vrot.slane %v2070, %v2074
    %v2109 = vunpack.c.l.b16 %v2038
    %v2110 = vunpack.c.l.b16 %v2039
    %v2111 = vunpack.c.l.b16 %v2040
    %v2112 = vunpack.c.l.b16 %v2041
    %v2113 = vunpack.c.l.b16 %v2042
    %v2114 = vunpack.c.l.b16 %v2043
    %v2115 = vunpack.c.l.b16 %v2044
    %v2116 = vunpack.c.l.b16 %v2045
    %v2117 = vunpack.c.l.b16 %v2046
    %v2118 = vunpack.c.l.b16 %v2047
    %v2119 = vunpack.c.l.b16 %v2048
    %v2120 = vunpack.c.l.b16 %v2049
    %v2121 = vunpack.c.l.b16 %v2050
    %v2122 = vunpack.c.l.b16 %v2051
    %v2123 = vunpack.c.l.b16 %v2052
    %v2124 = vunpack.c.l.b16 %v2053
    %v2125 = vunpack.c.l.b16 %v2054
    %v2126 = vunpack.c.l.b16 %v2055
    %v2127 = vunpack.c.l.b16 %v2056
    %v2128 = vunpack.c.l.b16 %v2057
    %v2129 = vunpack.c.l.b16 %v2058
    %v2130 = vunpack.c.l.b16 %v2059
    %v2131 = vunpack.c.l.b16 %v2060
    %v2132 = vunpack.c.l.b16 %v2061
    %v2133 = vunpack.c.l.b16 %v2062
    %v2134 = vunpack.c.l.b16 %v2063
    %v2135 = vunpack.c.l.b16 %v2064
    %v2136 = vunpack.c.l.b16 %v2065
    %v2137 = vunpack.c.l.b16 %v2066
    %v2138 = vunpack.c.l.b16 %v2067
    %v2139 = vunpack.c.l.b16 %v2068
    %v2140 = vunpack.c.l.b16 %v2069
    %v2141 = vpack.c.b16 %v2110, %v2109
    %v2142 = vpack.c.b16 %v2112, %v2111
    %v2143 = vpack.c.b16 %v2114, %v2113
    %v2144 = vpack.c.b16 %v2116, %v2115
    %v2145 = vpack.c.b16 %v2118, %v2117
    %v2146 = vpack.c.b16 %v2120, %v2119
    %v2147 = vpack.c.b16 %v2122, %v2121
    %v2148 = vpack.c.b16 %v2124, %v2123
    %v2149 = vpack.c.b16 %v2126, %v2125
    %v2150 = vpack.c.b16 %v2128, %v2127
    %v2151 = vpack.c.b16 %v2130, %v2129
    %v2152 = vpack.c.b16 %v2132, %v2131
    %v2153 = vpack.c.b16 %v2134, %v2133
    %v2154 = vpack.c.b16 %v2136, %v2135
    %v2155 = vpack.c.b16 %v2138, %v2137
    %v2156 = vpack.c.b16 %v2140, %v2139
    %2173 = vmatprep.subr.bf16.mxu0 0
    %2174 = vmatpush1.bf16.msra.mxu0 %v2141
    %2175 = vmatprep.subr.bf16.mxu0 0
    %2176 = vmatpush1.bf16.msra.mxu0 %v2142
    %2177 = vmatprep.subr.bf16.mxu0 0
    %2178 = vmatpush1.bf16.msra.mxu0 %v2143
    %2179 = vmatprep.subr.bf16.mxu0 0
    %2180 = vmatpush1.bf16.msra.mxu0 %v2144
    %2181 = vmatprep.subr.bf16.mxu0 0
    %2182 = vmatpush1.bf16.msra.mxu0 %v2145
    %2183 = vmatprep.subr.bf16.mxu0 0
    %2184 = vmatpush1.bf16.msra.mxu0 %v2146
    %2185 = vmatprep.subr.bf16.mxu0 0
    %2186 = vmatpush1.bf16.msra.mxu0 %v2147
    %2187 = vmatprep.subr.bf16.mxu0 0
    %2188 = vmatpush1.bf16.msra.mxu0 %v2148
    %2189 = vmatprep.subr.bf16.mxu0 0
    %2190 = vmatpush1.bf16.msra.mxu0 %v2149
    %2191 = vmatprep.subr.bf16.mxu0 0
    %2192 = vmatpush1.bf16.msra.mxu0 %v2150
    %2193 = vmatprep.subr.bf16.mxu0 0
    %2194 = vmatpush1.bf16.msra.mxu0 %v2151
    %2195 = vmatprep.subr.bf16.mxu0 0
    %2196 = vmatpush1.bf16.msra.mxu0 %v2152
    %2197 = vmatprep.subr.bf16.mxu0 0
    %2198 = vmatpush1.bf16.msra.mxu0 %v2153
    %2199 = vmatprep.subr.bf16.mxu0 0
    %2200 = vmatpush1.bf16.msra.mxu0 %v2154
    %2201 = vmatprep.subr.bf16.mxu0 0
    %2202 = vmatpush1.bf16.msra.mxu0 %v2155
    %2203 = vmatprep.subr.bf16.mxu0 0
    %2204 = vmatpush1.bf16.msra.mxu0 %v2156
    %2205 = vmatprep.mubr.bf16.mxu0 %v2037
    %2206 = vmatmul.mubr.bf16.gmra.mrb[0].mxu0 %v2036
    %v2207 = vpop.f32.mrb[0].mxu0
    %v2208 = vadd.f32 %v2075, %v2207
    %v2209 = vpop.f32.mrb[0].mxu0
    %v2210 = vpop.f32.mrb[0].mxu0
    %v2211 = vpop.f32.mrb[0].mxu0
    %2212 = vdwg.mxu0
    %vm2213 = vcmp.ge.f32.partialorder %v2208, 0.0
    %v2214 = vmul.f32 %v2208, 0.2
    %v2215 = vsel %vm2213, %v2208, %v2214
    %v2216 = vpack.c.bf16 %v2215, %v2215
    %v2217 = vld [vmem:[%s7] sm:$0xf]
    %v2218 = vld [vmem:[%s7 + $0x4] sm:$0xf]
    %v2219 = vld [vmem:[%s7 + $0x8] sm:$0xf]
    %v2220 = vld [vmem:[%s7 + $0xc] sm:$0xf]
    %v2221 = vld [vmem:[%s7 + $0x10] sm:$0xf]
    %v2222 = vld [vmem:[%s7 + $0x14] sm:$0xf]
    %v2223 = vld [vmem:[%s7 + $0x18] sm:$0xf]
    %v2224 = vld [vmem:[%s7 + $0x1c] sm:$0xf]
    %v2225 = vld [vmem:[%s7 + $0x20] sm:$0xf]
    %v2226 = vld [vmem:[%s7 + $0x24] sm:$0xf]
    %v2227 = vld [vmem:[%s7 + $0x28] sm:$0xf]
    %v2228 = vld [vmem:[%s7 + $0x2c] sm:$0xf]
    %v2229 = vld [vmem:[%s7 + $0x30] sm:$0xf]
    %v2230 = vld [vmem:[%s7 + $0x34] sm:$0xf]
    %v2231 = vld [vmem:[%s7 + $0x38] sm:$0xf]
    %v2232 = vld [vmem:[%s7 + $0x3c] sm:$0xf]
    %v2233 = vld [vmem:[%s8] sm:$0x1]
    %v2235 = vlaneseq
    %v2236 = vshrl.u32 %v2235, 7
    %v2237 = vsub.s32 0, %v2236
    %v2238 = vrot.slane %v2233, %v2237
    %v2256 = vunpack.c.l.b16 %v2217
    %v2257 = vunpack.c.l.b16 %v2218
    %v2258 = vunpack.c.l.b16 %v2219
    %v2259 = vunpack.c.l.b16 %v2220
    %v2260 = vunpack.c.l.b16 %v2221
    %v2261 = vunpack.c.l.b16 %v2222
    %v2262 = vunpack.c.l.b16 %v2223
    %v2263 = vunpack.c.l.b16 %v2224
    %v2264 = vunpack.c.l.b16 %v2225
    %v2265 = vunpack.c.l.b16 %v2226
    %v2266 = vunpack.c.l.b16 %v2227
    %v2267 = vunpack.c.l.b16 %v2228
    %v2268 = vunpack.c.l.b16 %v2229
    %v2269 = vunpack.c.l.b16 %v2230
    %v2270 = vunpack.c.l.b16 %v2231
    %v2271 = vunpack.c.l.b16 %v2232
    %v2272 = vpack.c.b16 %v2257, %v2256
    %v2273 = vpack.c.b16 %v2259, %v2258
    %v2274 = vpack.c.b16 %v2261, %v2260
    %v2275 = vpack.c.b16 %v2263, %v2262
    %v2276 = vpack.c.b16 %v2265, %v2264
    %v2277 = vpack.c.b16 %v2267, %v2266
    %v2278 = vpack.c.b16 %v2269, %v2268
    %v2279 = vpack.c.b16 %v2271, %v2270
    %2288 = vmatprep.subr.bf16.mxu0 0
    %2289 = vmatpush1.bf16.msra.mxu0 %v2272
    %2290 = vmatprep.subr.bf16.mxu0 0
    %2291 = vmatpush1.bf16.msra.mxu0 %v2273
    %2292 = vmatprep.subr.bf16.mxu0 0
    %2293 = vmatpush1.bf16.msra.mxu0 %v2274
    %2294 = vmatprep.subr.bf16.mxu0 0
    %2295 = vmatpush1.bf16.msra.mxu0 %v2275
    %2296 = vmatprep.subr.bf16.mxu0 0
    %2297 = vmatpush1.bf16.msra.mxu0 %v2276
    %2298 = vmatprep.subr.bf16.mxu0 0
    %2299 = vmatpush1.bf16.msra.mxu0 %v2277
    %2300 = vmatprep.subr.bf16.mxu0 0
    %2301 = vmatpush1.bf16.msra.mxu0 %v2278
    %2302 = vmatprep.subr.bf16.mxu0 0
    %2303 = vmatpush1.bf16.msra.mxu0 %v2279
    %2304 = vmatprep.subr.bf16.mxu0 0
    %2305 = vmatpush1.bf16.msra.mxu0 0
    %2306 = vmatprep.subr.bf16.mxu0 0
    %2307 = vmatpush1.bf16.msra.mxu0 0
    %2308 = vmatprep.subr.bf16.mxu0 0
    %2309 = vmatpush1.bf16.msra.mxu0 0
    %2310 = vmatprep.subr.bf16.mxu0 0
    %2311 = vmatpush1.bf16.msra.mxu0 0
    %2312 = vmatprep.subr.bf16.mxu0 0
    %2313 = vmatpush1.bf16.msra.mxu0 0
    %2314 = vmatprep.subr.bf16.mxu0 0
    %2315 = vmatpush1.bf16.msra.mxu0 0
    %2316 = vmatprep.subr.bf16.mxu0 0
    %2317 = vmatpush1.bf16.msra.mxu0 0
    %2318 = vmatprep.subr.bf16.mxu0 0
    %2319 = vmatpush1.bf16.msra.mxu0 0
    %2320 = vmatprep.mubr.bf16.mxu0 0
    %2321 = vmatmul.mubr.bf16.gmra.mrb[0].mxu0 %v2216
    %v2322 = vpop.f32.mrb[0].mxu0
    %v2323 = vadd.f32 %v2238, %v2322
    %v2324 = vpop.f32.mrb[0].mxu0
    %v2325 = vpop.f32.mrb[0].mxu0
    %v2326 = vpop.f32.mrb[0].mxu0
    %2327 = vdwg.mxu0
    %vm2328 = vcmp.ge.f32.partialorder %v2323, 0.0
    %v2329 = vmul.f32 %v2323, 0.2
    %v2330 = vsel %vm2328, %v2323, %v2329
    %v2331 = vpack.c.bf16 %v2330, %v2330
    %v2332 = vld [vmem:[%s9] sm:$0xf]
    %v2333 = vld [vmem:[%s9 + $0x4] sm:$0xf]
    %v2334 = vld [vmem:[%s9 + $0x8] sm:$0xf]
    %v2335 = vld [vmem:[%s9 + $0xc] sm:$0xf]
    %v2336 = vld [vmem:[%s9 + $0x10] sm:$0xf]
    %v2337 = vld [vmem:[%s9 + $0x14] sm:$0xf]
    %v2338 = vld [vmem:[%s9 + $0x18] sm:$0xf]
    %v2339 = vld [vmem:[%s9 + $0x1c] sm:$0xf]
    %v2340 = vld [vmem:[%s10] sm:$0x1]
    %v2342 = vlaneseq
    %v2343 = vshrl.u32 %v2342, 7
    %v2344 = vsub.s32 0, %v2343
    %v2345 = vrot.slane %v2340, %v2344
    %v2355 = vunpack.c.l.b16 %v2332
    %v2356 = vunpack.c.l.b16 %v2333
    %v2357 = vunpack.c.l.b16 %v2334
    %v2358 = vunpack.c.l.b16 %v2335
    %v2359 = vunpack.c.l.b16 %v2336
    %v2360 = vunpack.c.l.b16 %v2337
    %v2361 = vunpack.c.l.b16 %v2338
    %v2362 = vunpack.c.l.b16 %v2339
    %v2363 = vpack.c.b16 %v2356, %v2355
    %v2364 = vpack.c.b16 %v2358, %v2357
    %v2365 = vpack.c.b16 %v2360, %v2359
    %v2366 = vpack.c.b16 %v2362, %v2361
    %vm2371 = vcmask 523264
    %v2373 = vsel %vm2371, %v2331, 0
    %2375 = vmatprep.subr.bf16.mxu0 0
    %2376 = vmatpush1.bf16.msra.mxu0 %v2363
    %2377 = vmatprep.subr.bf16.mxu0 0
    %2378 = vmatpush1.bf16.msra.mxu0 %v2364
    %2379 = vmatprep.subr.bf16.mxu0 0
    %2380 = vmatpush1.bf16.msra.mxu0 %v2365
    %2381 = vmatprep.subr.bf16.mxu0 0
    %2382 = vmatpush1.bf16.msra.mxu0 %v2366
    %2383 = vmatprep.subr.bf16.mxu0 0
    %2384 = vmatpush1.bf16.msra.mxu0 0
    %2385 = vmatprep.subr.bf16.mxu0 0
    %2386 = vmatpush1.bf16.msra.mxu0 0
    %2387 = vmatprep.subr.bf16.mxu0 0
    %2388 = vmatpush1.bf16.msra.mxu0 0
    %2389 = vmatprep.subr.bf16.mxu0 0
    %2390 = vmatpush1.bf16.msra.mxu0 0
    %2391 = vmatprep.subr.bf16.mxu0 0
    %2392 = vmatpush1.bf16.msra.mxu0 0
    %2393 = vmatprep.subr.bf16.mxu0 0
    %2394 = vmatpush1.bf16.msra.mxu0 0
    %2395 = vmatprep.subr.bf16.mxu0 0
    %2396 = vmatpush1.bf16.msra.mxu0 0
    %2397 = vmatprep.subr.bf16.mxu0 0
    %2398 = vmatpush1.bf16.msra.mxu0 0
    %2399 = vmatprep.subr.bf16.mxu0 0
    %2400 = vmatpush1.bf16.msra.mxu0 0
    %2401 = vmatprep.subr.bf16.mxu0 0
    %2402 = vmatpush1.bf16.msra.mxu0 0
    %2403 = vmatprep.subr.bf16.mxu0 0
    %2404 = vmatpush1.bf16.msra.mxu0 0
    %2405 = vmatprep.subr.bf16.mxu0 0
    %2406 = vmatpush1.bf16.msra.mxu0 0
    %2407 = vmatprep.mubr.bf16.mxu0 0
    %2408 = vmatmul.mubr.bf16.gmra.mrb[0].mxu0 %v2373
    %v2409 = vpop.f32.mrb[0].mxu0
    %v2410 = vadd.f32 %v2345, %v2409
    %v2411 = vpop.f32.mrb[0].mxu0
    %v2412 = vpop.f32.mrb[0].mxu0
    %v2413 = vpop.f32.mrb[0].mxu0
    %2414 = vdwg.mxu0
    %v2415 = vmul.f32 %v2410, 0.5
    %v2416 = vmul.f32 %v2415, 1.442695
    %v2417 = vpow.pop %v2416
    %v2418 = vld [vmem:[%s11] sm:$0x3]
    %2420 = vrot.lane.b32.xlu0 %v2417, 120
    %v2421 = vpop.permute.xlu0 %2420
    %v2423 = vmul.f32 %v2418, %v2421
    %v2424 = vadd.f32 %v2423, %v2410
    %vm2425 = vcmask 58368
    %2426 = vst.msk [vmem:[#allocation7] sm:$0x3] %vm2425, %v2424
    %2427 = vst.msk [vmem:[#allocation8] sm:$0x3] %vm2425, %v2410
    %2429 = vrot.lane.b32.xlu0 %v2410, 120
    %v2430 = vpop.permute.xlu0 %2429
    %2432 = vst.msk [vmem:[#allocation10] sm:$0x3] %vm2425, %v2430
    // Predicated region
    $region58: #{encoder_forward.1} parent=1 // pred_check
      _
    $region59: #{encoder_forward.1} parent=1 // pred_check_branch
      %2434 = sbr.rel (0) target = $region61
    $region60: #{encoder_forward.1} parent=1 // pred_region
      %s2436 = ssub.s32 32, 32
      %2437 = vsyncadd [#allocation4], %s2436
      %s2439 = sshll.u32 [#allocation7], 4
      %s2440 = int_to_ptr.vmem [resolvable:$true] %s2439
      %2442 = dma.vmem_to_hbm [thread:$0]  %s2440, 32, %s12, [#allocation4]
    $region61: #{encoder_forward.1} parent=1 // pred_fallthru
      _
    // Predicated region
    $region62: #{encoder_forward.1} parent=1 // pred_check
      _
    $region63: #{encoder_forward.1} parent=1 // pred_check_branch
      %2444 = sbr.rel (0) target = $region65
    $region64: #{encoder_forward.1} parent=1 // pred_region
      %s2446 = ssub.s32 32, 32
      %2447 = vsyncadd [#allocation9], %s2446
      %s2449 = sshll.u32 [#allocation8], 4
      %s2450 = int_to_ptr.vmem [resolvable:$true] %s2449
      %2452 = dma.vmem_to_hbm [thread:$0]  %s2450, 32, %s13, [#allocation9]
    $region65: #{encoder_forward.1} parent=1 // pred_fallthru
      _
    // Predicated region
    $region66: #{encoder_forward.1} parent=1 // pred_check
      _
    $region67: #{encoder_forward.1} parent=1 // pred_check_branch
      %2454 = sbr.rel (0) target = $region69
    $region68: #{encoder_forward.1} parent=1 // pred_region
      %s2456 = ssub.s32 32, 32
      %2457 = vsyncadd [#allocation9], %s2456
      %s2459 = sshll.u32 [#allocation10], 4
      %s2460 = int_to_ptr.vmem [resolvable:$true] %s2459
      %2462 = dma.vmem_to_hbm [thread:$0]  %s2460, 32, %s14, [#allocation9]
    $region69: #{encoder_forward.1} parent=1 // pred_fallthru
      _
    // Predicated region
    $region70: #{encoder_forward.1} parent=1 // pred_check
      _
    $region71: #{encoder_forward.1} parent=1 // pred_check_branch
      %2464 = sbr.rel (0) target = $region73
    $region72: #{encoder_forward.1} parent=1 // pred_region
      %2465 = dma.done [#allocation4], 32
    $region73: #{encoder_forward.1} parent=1 // pred_fallthru
      _
    // Predicated region
    $region74: #{encoder_forward.1} parent=1 // pred_check
      _
    $region75: #{encoder_forward.1} parent=1 // pred_check_branch
      %2467 = sbr.rel (0) target = $region77
    $region76: #{encoder_forward.1} parent=1 // pred_region
      %2468 = dma.done [#allocation9], 32
    $region77: #{encoder_forward.1} parent=1 // pred_fallthru
      _
    // Predicated region
    $region78: #{encoder_forward.1} parent=1 // pred_check
      _
    $region79: #{encoder_forward.1} parent=1 // pred_check_branch
      %2470 = sbr.rel (0) target = $region81
    $region80: #{encoder_forward.1} parent=1 // pred_region
      %2471 = dma.done [#allocation9], 32
    $region81: #{encoder_forward.1} parent=1 // pred_fallthru
      _
    %2472 = vsyncpa [#allocation3], 1
    %2473 = vsyncpa [#allocation6], 1
    %2474 = vsyncpa [#allocation4], 1
    %2475 = vsyncpa [#allocation9], 1

</llo_original>
